<compile_context>
chip_gen: v7x
topology: tpu7x:2x2x1
jax: 0.10.0
libtpu: 0.0.40
codegen_flags: <defaults>
</compile_context>

<pallas_src>
import functools

import jax
import jax.numpy as jnp
from jax.experimental import pallas as pl
from jax.experimental.pallas import tpu as pltpu


def _round_up(x, m):
    return ((x + m - 1) // m) * m


def _cdiv(a, b):
    return -(-a // b)


def encoder_kernel(x_ref, w1_ref, b1_ref, w2_ref, b2_ref, w3_ref, b3_ref, o_ref):
    # MXU matmuls in bf16 with f32 accumulation; all elementwise math (bias
    # add, ReLU, sigmoid) stays f32 (v5e has no bf16 VPU/EUP).
    x = x_ref[...]                                        # (bt, 784) f32
    h1 = jnp.dot(x.astype(jnp.bfloat16), w1_ref[...],
                 preferred_element_type=jnp.float32) + b1_ref[...]
    h1 = jnp.maximum(h1, 0.0)                             # ReLU
    h2 = jnp.dot(h1.astype(jnp.bfloat16), w2_ref[...],
                 preferred_element_type=jnp.float32) + b2_ref[...]
    h2 = jnp.maximum(h2, 0.0)                             # ReLU (padded lanes stay 0)
    h3 = jnp.dot(h2.astype(jnp.bfloat16), w3_ref[...],
                 preferred_element_type=jnp.float32) + b3_ref[...]
    o_ref[...] = jax.nn.sigmoid(h3)                       # (bt, E) store, no lane padding


def prepare_encoder_params(params):
    """One-time pad + cast of the raw (f32) params for the kernel.

    Hoisted out of the per-call path: weights go to bf16 for the MXU, the
    tiny hidden dim (32) is zero-padded to 128 lanes so h2 is lane-dense.
    The output dim E is NOT padded.
    """
    w1, b1, w2, b2, w3, b3 = params
    H2 = w2.shape[1]
    H2p = _round_up(H2, 128)                                             # 32 -> 128
    w1b = w1.astype(jnp.bfloat16)                                        # (784, 512)
    w2b = jnp.pad(w2, ((0, 0), (0, H2p - H2))).astype(jnp.bfloat16)      # (512, 128)
    w3b = jnp.pad(w3, ((0, H2p - H2), (0, 0))).astype(jnp.bfloat16)      # (128, E)
    b1f = b1.astype(jnp.float32)                                         # (1, 512)
    b2f = jnp.pad(b2, ((0, 0), (0, H2p - H2))).astype(jnp.float32)       # (1, 128)
    b3f = b3.astype(jnp.float32)                                         # (1, E)
    return (w1b, b1f, w2b, b2f, w3b, b3f)


def _choose_batch_tile(B, batch_tile):
    """Pick (bt, B_pad): sublane-aligned batch tile and padded batch size."""
    B8 = _round_up(B, 8)
    # Small batches: a single grid step, tile == (sublane-rounded) batch.
    if B8 <= batch_tile and B8 < 512:
        return B8, B8
    # Larger batches: at least 2 grid steps so the "parallel" axis can shard
    # across both v7x TensorCores; tiles capped at batch_tile and bumped to a
    # multiple of 256 (fills the v6e/v7x 256-wide MXU M dim) only when that
    # does not add extra padded rows (kernel is HBM-bound on x).
    n = max(2, _cdiv(B8, batch_tile))
    bt = _round_up(_cdiv(B8, n), 8)
    bt256 = _round_up(bt, 256)
    if bt256 <= batch_tile and _round_up(B8, bt256) == _round_up(B8, bt):
        bt = bt256
    return bt, _round_up(B8, bt)


@functools.partial(jax.jit, static_argnames=("batch_tile",))
def encoder_forward(x_nchw, prepared_params, *, batch_tile=512):
    """x_nchw: (B, 1, 28, 28) float32.  Returns (B, encoded_space_dim) float32."""
    w1b, b1f, w2b, b2f, w3b, b3f = prepared_params
    B = x_nchw.shape[0]
    x = x_nchw.reshape(B, -1)            # nn.Flatten(start_dim=1): (B, 784)
    D_in = x.shape[1]                    # 784
    H1 = w1b.shape[1]                    # 512
    H2p = w2b.shape[1]                   # 128 (padded 32)
    E = w3b.shape[1]                     # encoded_space_dim (unpadded)

    bt, B_pad = _choose_batch_tile(B, batch_tile)
    grid = (B_pad // bt,)
    if B_pad > B:
        x = jnp.pad(x, ((0, B_pad - B), (0, 0)))

    # --- VMEM budget: ~2x real footprint, small safety floor, v7x-safe cap ---
    weight_bytes = ((w1b.size + w2b.size + w3b.size) * 2
                    + (b1f.size + b2f.size + b3f.size) * 4)
    vmem_est = (2 * bt * D_in * 4                         # double-buffered x tiles (f32)
                + 2 * bt * E * 4                          # double-buffered out tiles (f32)
                + 2 * weight_bytes                        # weights/biases (default 2x buffered)
                + bt * (D_in // 2 + 2 * H1 + H2p + E) * 4)  # live intermediates
    vmem_limit = int(min(max(2 * vmem_est, 8 * 1024 * 1024), 48 * 1024 * 1024))

    cost = pl.CostEstimate(
        flops=2 * B_pad * (D_in * H1 + H1 * H2p + H2p * E),
        transcendentals=B_pad * E,
        bytes_accessed=B_pad * D_in * 4 + weight_bytes + B_pad * E * 4,
    )

    out = pl.pallas_call(
        encoder_kernel,
        out_shape=jax.ShapeDtypeStruct((B_pad, E), jnp.float32),
        grid_spec=pltpu.PrefetchScalarGridSpec(
            num_scalar_prefetch=0,
            grid=grid,
            in_specs=[
                pl.BlockSpec((bt, D_in), lambda i: (i, 0)),   # x tile (f32)
                pl.BlockSpec((D_in, H1), lambda i: (0, 0)),   # W1 (bf16)
                pl.BlockSpec((1, H1), lambda i: (0, 0)),      # b1
                pl.BlockSpec((H1, H2p), lambda i: (0, 0)),    # W2 (bf16, 32->128)
                pl.BlockSpec((1, H2p), lambda i: (0, 0)),     # b2 (padded)
                pl.BlockSpec((H2p, E), lambda i: (0, 0)),     # W3 (bf16, rows padded)
                pl.BlockSpec((1, E), lambda i: (0, 0)),       # b3 (unpadded)
            ],
            out_specs=pl.BlockSpec((bt, E), lambda i: (i, 0)),
        ),
        compiler_params=pltpu.CompilerParams(
            dimension_semantics=("parallel",),
            vmem_limit_bytes=vmem_limit,
        ),
        cost_estimate=cost,
    )(x, w1b, b1f, w2b, b2f, w3b, b3f)

    return out[:B] if B_pad > B else out


def init_params(key, encoded_space_dim):
    """Deterministic init matching PyTorch nn.Linear default (U[-1/sqrt(fan_in), ...])."""
    def linear(k, fan_in, fan_out):
        kw, kb = jax.random.split(k)
        bound = 1.0 / jnp.sqrt(fan_in)
        # PyTorch stores (out, in); we keep (in, out) for x @ W in the kernel.
        w = jax.random.uniform(kw, (fan_in, fan_out), jnp.float32, -bound, bound)
        b = jax.random.uniform(kb, (1, fan_out), jnp.float32, -bound, bound)
        return w, b

    k1, k2, k3 = jax.random.split(key, 3)
    w1, b1 = linear(k1, 784, 512)
    w2, b2 = linear(k2, 512, 32)
    w3, b3 = linear(k3, 32, encoded_space_dim)
    return (w1, b1, w2, b2, w3, b3)


def _reference(x_nchw, params, *, bf16_matmul):
    """Pure-JAX reference of the same math (optionally bf16 MXU operands)."""
    w1, b1, w2, b2, w3, b3 = params
    xf = x_nchw.reshape(x_nchw.shape[0], -1)

    def mm(a, b):
        if bf16_matmul:
            a = a.astype(jnp.bfloat16)
            b = b.astype(jnp.bfloat16)
        return jnp.dot(a, b, preferred_element_type=jnp.float32)

    h1 = jnp.maximum(mm(xf, w1) + b1, 0.0)
    h2 = jnp.maximum(mm(h1, w2) + b2, 0.0)
    return jax.nn.sigmoid(mm(h2, w3) + b3)


if __name__ == "__main__":
    key = jax.random.PRNGKey(0)
    k_x, k_p = jax.random.split(key)

    encoded_space_dim = 16
    params = init_params(k_p, encoded_space_dim)
    prepared = prepare_encoder_params(params)   # one-time pad/cast (hoisted out of fwd)

    ok = True

    # Case 1: tiny MNIST-like batch (single grid step, tile clamped to 8 rows).
    B = 8
    x = jax.random.normal(k_x, (B, 1, 28, 28), dtype=jnp.float32)
    out = jax.block_until_ready(encoder_forward(x, prepared))
    ok &= out.shape == (B, encoded_space_dim)
    ok &= bool(jnp.allclose(out, _reference(x, params, bf16_matmul=True), atol=1e-3, rtol=1e-3))
    ok &= bool(jnp.allclose(out, _reference(x, params, bf16_matmul=False), atol=3e-2, rtol=3e-2))

    # Case 2: batch not divisible by an explicit small tile (padding + grid of 3).
    B2 = 40
    x2 = jax.random.normal(jax.random.PRNGKey(1), (B2, 1, 28, 28), dtype=jnp.float32)
    out2 = jax.block_until_ready(encoder_forward(x2, prepared, batch_tile=16))
    ok &= out2.shape == (B2, encoded_space_dim)
    ok &= bool(jnp.allclose(out2, _reference(x2, params, bf16_matmul=True), atol=1e-3, rtol=1e-3))

    # Case 3: batch large enough to take the multi-tile (>=2 grid steps) path.
    B3 = 520
    x3 = jax.random.normal(jax.random.PRNGKey(2), (B3, 1, 28, 28), dtype=jnp.float32)
    out3 = jax.block_until_ready(encoder_forward(x3, prepared))
    ok &= out3.shape == (B3, encoded_space_dim)
    ok &= bool(jnp.allclose(out3, _reference(x3, params, bf16_matmul=True), atol=1e-3, rtol=1e-3))

    assert ok
    print("KERNEL_OK")
</pallas_src>

<mosaic_0001>
module attributes {stable_mosaic.version = 11 : i64} {
  func.func @encoder_kernel(%arg0: i32, %arg1: memref<8x784xf32, #tpu.memory_space<vmem>>, %arg2: memref<784x512xbf16, #tpu.memory_space<vmem>>, %arg3: memref<1x512xf32, #tpu.memory_space<vmem>>, %arg4: memref<512x128xbf16, #tpu.memory_space<vmem>>, %arg5: memref<1x128xf32, #tpu.memory_space<vmem>>, %arg6: memref<128x16xbf16, #tpu.memory_space<vmem>>, %arg7: memref<1x16xf32, #tpu.memory_space<vmem>>, %arg8: memref<8x16xf32, #tpu.memory_space<vmem>>) attributes {dimension_semantics = [#tpu.dimension_semantics<parallel>], iteration_bounds = array<i64: 1>, scalar_prefetch = 0 : i64, scratch_operands = 0 : i64, tpu.core_type = #tpu.core_type<tc>, window_params = [{transform_indices = @transform_0, window_bounds = array<i64: 8, 784>}, {pipeline_mode = #tpu.pipeline_mode<synchronous>, transform_indices = @transform_1, window_bounds = array<i64: 784, 512>}, {pipeline_mode = #tpu.pipeline_mode<synchronous>, transform_indices = @transform_2, window_bounds = array<i64: 1, 512>}, {pipeline_mode = #tpu.pipeline_mode<synchronous>, transform_indices = @transform_3, window_bounds = array<i64: 512, 128>}, {pipeline_mode = #tpu.pipeline_mode<synchronous>, transform_indices = @transform_4, window_bounds = array<i64: 1, 128>}, {pipeline_mode = #tpu.pipeline_mode<synchronous>, transform_indices = @transform_5, window_bounds = array<i64: 128, 16>}, {pipeline_mode = #tpu.pipeline_mode<synchronous>, transform_indices = @transform_6, window_bounds = array<i64: 1, 16>}, {transform_indices = @transform_7, window_bounds = array<i64: 8, 16>}]} {
    %c0 = arith.constant 0 : index
    %c0_0 = arith.constant 0 : index
    %0 = vector.load %arg1[%c0, %c0_0] : memref<8x784xf32, #tpu.memory_space<vmem>>, vector<8x784xf32>
    %1 = arith.truncf %0 : vector<8x784xf32> to vector<8x784xbf16>
    %c0_1 = arith.constant 0 : index
    %c0_2 = arith.constant 0 : index
    %2 = vector.load %arg2[%c0_1, %c0_2] : memref<784x512xbf16, #tpu.memory_space<vmem>>, vector<784x512xbf16>
    %cst = arith.constant dense<0.000000e+00> : vector<8x512xf32>
    %3 = tpu.matmul %1, %2, %cst {dimension_numbers = #tpu.dot_dimension_numbers<[1], [0], [0], [1], [0, 0, 1, 1], [], []>} : vector<8x784xbf16>, vector<784x512xbf16>, vector<8x512xf32> -> vector<8x512xf32>
    %c0_3 = arith.constant 0 : index
    %c0_4 = arith.constant 0 : index
    %4 = vector.load %arg3[%c0_3, %c0_4] : memref<1x512xf32, #tpu.memory_space<vmem>>, vector<1x512xf32>
    %5 = vector.broadcast %4 : vector<1x512xf32> to vector<8x512xf32>
    %6 = arith.addf %3, %5 : vector<8x512xf32>
    %cst_5 = arith.constant 0.000000e+00 : f32
    %7 = vector.broadcast %cst_5 : f32 to vector<8x512xf32>
    %8 = arith.maximumf %6, %7 : vector<8x512xf32>
    %9 = arith.truncf %8 : vector<8x512xf32> to vector<8x512xbf16>
    %c0_6 = arith.constant 0 : index
    %c0_7 = arith.constant 0 : index
    %10 = vector.load %arg4[%c0_6, %c0_7] : memref<512x128xbf16, #tpu.memory_space<vmem>>, vector<512x128xbf16>
    %cst_8 = arith.constant dense<0.000000e+00> : vector<8x128xf32>
    %11 = tpu.matmul %9, %10, %cst_8 {dimension_numbers = #tpu.dot_dimension_numbers<[1], [0], [0], [1], [0, 0, 1, 1], [], []>} : vector<8x512xbf16>, vector<512x128xbf16>, vector<8x128xf32> -> vector<8x128xf32>
    %c0_9 = arith.constant 0 : index
    %c0_10 = arith.constant 0 : index
    %12 = vector.load %arg5[%c0_9, %c0_10] : memref<1x128xf32, #tpu.memory_space<vmem>>, vector<1x128xf32>
    %13 = vector.broadcast %12 : vector<1x128xf32> to vector<8x128xf32>
    %14 = arith.addf %11, %13 : vector<8x128xf32>
    %cst_11 = arith.constant 0.000000e+00 : f32
    %15 = vector.broadcast %cst_11 : f32 to vector<8x128xf32>
    %16 = arith.maximumf %14, %15 : vector<8x128xf32>
    %17 = arith.truncf %16 : vector<8x128xf32> to vector<8x128xbf16>
    %c0_12 = arith.constant 0 : index
    %c0_13 = arith.constant 0 : index
    %18 = vector.load %arg6[%c0_12, %c0_13] : memref<128x16xbf16, #tpu.memory_space<vmem>>, vector<128x16xbf16>
    %cst_14 = arith.constant dense<0.000000e+00> : vector<8x16xf32>
    %19 = tpu.matmul %17, %18, %cst_14 {dimension_numbers = #tpu.dot_dimension_numbers<[1], [0], [0], [1], [0, 0, 1, 1], [], []>} : vector<8x128xbf16>, vector<128x16xbf16>, vector<8x16xf32> -> vector<8x16xf32>
    %c0_15 = arith.constant 0 : index
    %c0_16 = arith.constant 0 : index
    %20 = vector.load %arg7[%c0_15, %c0_16] : memref<1x16xf32, #tpu.memory_space<vmem>>, vector<1x16xf32>
    %21 = vector.broadcast %20 : vector<1x16xf32> to vector<8x16xf32>
    %22 = arith.addf %19, %21 : vector<8x16xf32>
    %23 = arith.negf %22 : vector<8x16xf32>
    %24 = math.exp %23 : vector<8x16xf32>
    %cst_17 = arith.constant 1.000000e+00 : f32
    %25 = vector.broadcast %cst_17 : f32 to vector<8x16xf32>
    %26 = arith.addf %25, %24 : vector<8x16xf32>
    %27 = arith.divf %25, %26 : vector<8x16xf32>
    %c0_18 = arith.constant 0 : index
    %c0_19 = arith.constant 0 : index
    %28 = vector.load %arg8[%c0_18, %c0_19] : memref<8x16xf32, #tpu.memory_space<vmem>>, vector<8x16xf32>
    tpu.vector_store %arg8[%c0_18, %c0_19], %27 {strides = array<i32>} : memref<8x16xf32, #tpu.memory_space<vmem>>, vector<8x16xf32>,
    return
  }
  func.func @transform_0(%arg0: i32) -> (i32, i32) {
    %c0_i32 = arith.constant 0 : i32
    %c0_i32_0 = arith.constant 0 : i32
    return %arg0, %c0_i32 : i32, i32
  }
  func.func @transform_1(%arg0: i32) -> (i32, i32) {
    %c0_i32 = arith.constant 0 : i32
    %c0_i32_0 = arith.constant 0 : i32
    %c0_i32_1 = arith.constant 0 : i32
    return %c0_i32, %c0_i32_0 : i32, i32
  }
  func.func @transform_2(%arg0: i32) -> (i32, i32) {
    %c0_i32 = arith.constant 0 : i32
    %c0_i32_0 = arith.constant 0 : i32
    %c0_i32_1 = arith.constant 0 : i32
    return %c0_i32, %c0_i32_0 : i32, i32
  }
  func.func @transform_3(%arg0: i32) -> (i32, i32) {
    %c0_i32 = arith.constant 0 : i32
    %c0_i32_0 = arith.constant 0 : i32
    %c0_i32_1 = arith.constant 0 : i32
    return %c0_i32, %c0_i32_0 : i32, i32
  }
  func.func @transform_4(%arg0: i32) -> (i32, i32) {
    %c0_i32 = arith.constant 0 : i32
    %c0_i32_0 = arith.constant 0 : i32
    %c0_i32_1 = arith.constant 0 : i32
    return %c0_i32, %c0_i32_0 : i32, i32
  }
  func.func @transform_5(%arg0: i32) -> (i32, i32) {
    %c0_i32 = arith.constant 0 : i32
    %c0_i32_0 = arith.constant 0 : i32
    %c0_i32_1 = arith.constant 0 : i32
    return %c0_i32, %c0_i32_0 : i32, i32
  }
  func.func @transform_6(%arg0: i32) -> (i32, i32) {
    %c0_i32 = arith.constant 0 : i32
    %c0_i32_0 = arith.constant 0 : i32
    %c0_i32_1 = arith.constant 0 : i32
    return %c0_i32, %c0_i32_0 : i32, i32
  }
  func.func @transform_7(%arg0: i32) -> (i32, i32) {
    %c0_i32 = arith.constant 0 : i32
    %c0_i32_0 = arith.constant 0 : i32
    return %arg0, %c0_i32 : i32, i32
  }
}

</mosaic_0001>

<llo_original>
// kernel: encoder_forward.1
$region0: #{encoder_forward.1}
  #allocation0 [shape = 'u32[]', space=smem, size = 0x4, offset = 0x4, fixed_abs, tag = 'smem constant byte address 0x4 - core index']
  #allocation1 [shape = 'u32[144,128]{1,0:T(1,128)}', space=vmem, size = 0x12000, scoped, tag = 'internal scratch']
  %s0 = inlined_call_operand.vmem [shape: f32[8,784], index: 0, kind: input, shape index: {}]
  %s1 = inlined_call_operand.hbm [shape: bf16[784,512], index: 1, kind: input, shape index: {}]
  %s2 = inlined_call_operand.vmem [shape: f32[1,512], index: 2, kind: input, shape index: {}]
  %s3 = inlined_call_operand.vmem [shape: bf16[512,128], index: 3, kind: input, shape index: {}]
  %s4 = inlined_call_operand.vmem [shape: f32[1,128], index: 4, kind: input, shape index: {}]
  %s5 = inlined_call_operand.vmem [shape: bf16[128,16], index: 5, kind: input, shape index: {}]
  %s6 = inlined_call_operand.vmem [shape: f32[1,16], index: 6, kind: input, shape index: {}]
  %s7 = inlined_call_operand.hbm [shape: f32[8,16], index: 7, kind: output, shape index: {}]
  %s8 = sld [smem:[#allocation0]]
  $region42: #{encoder_forward.1} parent=0
    _
  %s10 = ssub.s32 1, %s8
  %s11 = scalar_select 0, %s10, %s8
  $region1: #{encoder_forward.1} parent=0
    #allocation2 [shape = 'u8[802816]{0}', space=vmem, size = 0xc4000, scoped, tag = 'input window, operand 1, single buffered']
    #allocation3 [shape = 's32[1]{0}', space=sflag, size = 0x4, scoped, tag = 'scoped memory for encoder_forward.1']
    #allocation4 [shape = 's32[1]{0}', space=sflag, size = 0x4, scoped, tag = 'scoped memory for encoder_forward.1']
    #allocation5 [shape = 'u8[4096]{0}', space=vmem, size = 0x1000, scoped, tag = 'output window, operand 0, single buffered']
    %12 = vsyncpa [#allocation3], 0
    %13 = vsyncpa [#allocation4], 0
    // Predicated region
    $region2: #{encoder_forward.1} parent=1 // pred_check
      _
    $region3: #{encoder_forward.1} parent=1 // pred_check_branch
      %15 = sbr.rel (0) target = $region5
    $region4: #{encoder_forward.1} parent=1 // pred_region
      _
    $region5: #{encoder_forward.1} parent=1 // pred_fallthru
      _
    // Predicated region
    $region6: #{encoder_forward.1} parent=1 // pred_check
      _
    $region7: #{encoder_forward.1} parent=1 // pred_check_branch
      %17 = sbr.rel (0) target = $region9
    $region8: #{encoder_forward.1} parent=1 // pred_region
      %s19 = ssub.s32 25088, 25088
      %20 = vsyncadd [#allocation3], %s19
      %s21 = sshll.u32 [#allocation2], 4
      %s22 = int_to_ptr.vmem [resolvable:$true] %s21
      %27 = dma.hbm_to_vmem [thread:$0]  %s1, 25088, %s22, [#allocation3], 256, 256, 16
    $region9: #{encoder_forward.1} parent=1 // pred_fallthru
      _
    // Predicated region
    $region10: #{encoder_forward.1} parent=1 // pred_check
      _
    $region11: #{encoder_forward.1} parent=1 // pred_check_branch
      %29 = sbr.rel (0) target = $region13
    $region12: #{encoder_forward.1} parent=1 // pred_region
      _
    $region13: #{encoder_forward.1} parent=1 // pred_fallthru
      _
    // Predicated region
    $region14: #{encoder_forward.1} parent=1 // pred_check
      _
    $region15: #{encoder_forward.1} parent=1 // pred_check_branch
      %31 = sbr.rel (0) target = $region17
    $region16: #{encoder_forward.1} parent=1 // pred_region
      _
    $region17: #{encoder_forward.1} parent=1 // pred_fallthru
      _
    // Predicated region
    $region18: #{encoder_forward.1} parent=1 // pred_check
      _
    $region19: #{encoder_forward.1} parent=1 // pred_check_branch
      %33 = sbr.rel (0) target = $region21
    $region20: #{encoder_forward.1} parent=1 // pred_region
      _
    $region21: #{encoder_forward.1} parent=1 // pred_fallthru
      _
    // Predicated region
    $region22: #{encoder_forward.1} parent=1 // pred_check
      _
    $region23: #{encoder_forward.1} parent=1 // pred_check_branch
      %35 = sbr.rel (0) target = $region25
    $region24: #{encoder_forward.1} parent=1 // pred_region
      _
    $region25: #{encoder_forward.1} parent=1 // pred_fallthru
      _
    // Predicated region
    $region26: #{encoder_forward.1} parent=1 // pred_check
      _
    $region27: #{encoder_forward.1} parent=1 // pred_check_branch
      %37 = sbr.rel (0) target = $region29
    $region28: #{encoder_forward.1} parent=1 // pred_region
      _
    $region29: #{encoder_forward.1} parent=1 // pred_fallthru
      _
    // Predicated region
    $region30: #{encoder_forward.1} parent=1 // pred_check
      _
    $region31: #{encoder_forward.1} parent=1 // pred_check_branch
      %39 = sbr.rel (0) target = $region33
    $region32: #{encoder_forward.1} parent=1 // pred_region
      %40 = dma.done [#allocation3], 25088
    $region33: #{encoder_forward.1} parent=1 // pred_fallthru
      _
    %v42 = vld [vmem:[%s0] sm:$0xff]
    %v43 = vld [vmem:[%s0 + $0x8] sm:$0xff]
    %v44 = vld [vmem:[%s0 + $0x10] sm:$0xff]
    %v45 = vld [vmem:[%s0 + $0x18] sm:$0xff]
    %v46 = vld [vmem:[%s0 + $0x20] sm:$0xff]
    %v47 = vld [vmem:[%s0 + $0x28] sm:$0xff]
    %v48 = vld [vmem:[%s0 + $0x30] sm:$0xff]
    %v49 = vpack.c.bf16 %v42, %v42
    %v50 = vpack.c.bf16 %v43, %v43
    %v51 = vpack.c.bf16 %v44, %v44
    %v52 = vpack.c.bf16 %v45, %v45
    %v53 = vpack.c.bf16 %v46, %v46
    %v54 = vpack.c.bf16 %v47, %v47
    %v55 = vpack.c.bf16 %v48, %v48
    %v56 = vld [vmem:[#allocation2] sm:$0xff]
    %v57 = vld [vmem:[#allocation2 + $0x8] sm:$0xff]
    %v58 = vld [vmem:[#allocation2 + $0x10] sm:$0xff]
    %v59 = vld [vmem:[#allocation2 + $0x18] sm:$0xff]
    %v60 = vld [vmem:[#allocation2 + $0x20] sm:$0xff]
    %v61 = vld [vmem:[#allocation2 + $0x28] sm:$0xff]
    %v62 = vld [vmem:[#allocation2 + $0x30] sm:$0xff]
    %v63 = vld [vmem:[#allocation2 + $0x38] sm:$0xff]
    %v64 = vld [vmem:[#allocation2 + $0x40] sm:$0xff]
    %v65 = vld [vmem:[#allocation2 + $0x48] sm:$0xff]
    %v66 = vld [vmem:[#allocation2 + $0x50] sm:$0xff]
    %v67 = vld [vmem:[#allocation2 + $0x58] sm:$0xff]
    %v68 = vld [vmem:[#allocation2 + $0x60] sm:$0xff]
    %v69 = vld [vmem:[#allocation2 + $0x68] sm:$0xff]
    %v70 = vld [vmem:[#allocation2 + $0x70] sm:$0xff]
    %v71 = vld [vmem:[#allocation2 + $0x78] sm:$0xff]
    %v72 = vld [vmem:[#allocation2 + $0x80] sm:$0xff]
    %v73 = vld [vmem:[#allocation2 + $0x88] sm:$0xff]
    %v74 = vld [vmem:[#allocation2 + $0x90] sm:$0xff]
    %v75 = vld [vmem:[#allocation2 + $0x98] sm:$0xff]
    %v76 = vld [vmem:[#allocation2 + $0xa0] sm:$0xff]
    %v77 = vld [vmem:[#allocation2 + $0xa8] sm:$0xff]
    %v78 = vld [vmem:[#allocation2 + $0xb0] sm:$0xff]
    %v79 = vld [vmem:[#allocation2 + $0xb8] sm:$0xff]
    %v80 = vld [vmem:[#allocation2 + $0xc0] sm:$0xff]
    %v81 = vld [vmem:[#allocation2 + $0xc8] sm:$0xff]
    %v82 = vld [vmem:[#allocation2 + $0xd0] sm:$0xff]
    %v83 = vld [vmem:[#allocation2 + $0xd8] sm:$0xff]
    %v84 = vld [vmem:[#allocation2 + $0xe0] sm:$0xff]
    %v85 = vld [vmem:[#allocation2 + $0xe8] sm:$0xff]
    %v86 = vld [vmem:[#allocation2 + $0xf0] sm:$0xff]
    %v87 = vld [vmem:[#allocation2 + $0xf8] sm:$0xff]
    %v88 = vld [vmem:[#allocation2 + $0x100] sm:$0xff]
    %v89 = vld [vmem:[#allocation2 + $0x108] sm:$0xff]
    %v90 = vld [vmem:[#allocation2 + $0x110] sm:$0xff]
    %v91 = vld [vmem:[#allocation2 + $0x118] sm:$0xff]
    %v92 = vld [vmem:[#allocation2 + $0x120] sm:$0xff]
    %v93 = vld [vmem:[#allocation2 + $0x128] sm:$0xff]
    %v94 = vld [vmem:[#allocation2 + $0x130] sm:$0xff]
    %v95 = vld [vmem:[#allocation2 + $0x138] sm:$0xff]
    %v96 = vld [vmem:[#allocation2 + $0x140] sm:$0xff]
    %v97 = vld [vmem:[#allocation2 + $0x148] sm:$0xff]
    %v98 = vld [vmem:[#allocation2 + $0x150] sm:$0xff]
    %v99 = vld [vmem:[#allocation2 + $0x158] sm:$0xff]
    %v100 = vld [vmem:[#allocation2 + $0x160] sm:$0xff]
    %v101 = vld [vmem:[#allocation2 + $0x168] sm:$0xff]
    %v102 = vld [vmem:[#allocation2 + $0x170] sm:$0xff]
    %v103 = vld [vmem:[#allocation2 + $0x178] sm:$0xff]
    %v104 = vld [vmem:[#allocation2 + $0x180] sm:$0xff]
    %v105 = vld [vmem:[#allocation2 + $0x188] sm:$0xff]
    %v106 = vld [vmem:[#allocation2 + $0x190] sm:$0xff]
    %v107 = vld [vmem:[#allocation2 + $0x198] sm:$0xff]
    %v108 = vld [vmem:[#allocation2 + $0x1a0] sm:$0xff]
    %v109 = vld [vmem:[#allocation2 + $0x1a8] sm:$0xff]
    %v110 = vld [vmem:[#allocation2 + $0x1b0] sm:$0xff]
    %v111 = vld [vmem:[#allocation2 + $0x1b8] sm:$0xff]
    %v112 = vld [vmem:[#allocation2 + $0x1c0] sm:$0xff]
    %v113 = vld [vmem:[#allocation2 + $0x1c8] sm:$0xff]
    %v114 = vld [vmem:[#allocation2 + $0x1d0] sm:$0xff]
    %v115 = vld [vmem:[#allocation2 + $0x1d8] sm:$0xff]
    %v116 = vld [vmem:[#allocation2 + $0x1e0] sm:$0xff]
    %v117 = vld [vmem:[#allocation2 + $0x1e8] sm:$0xff]
    %v118 = vld [vmem:[#allocation2 + $0x1f0] sm:$0xff]
    %v119 = vld [vmem:[#allocation2 + $0x1f8] sm:$0xff]
    %v120 = vld [vmem:[#allocation2 + $0x200] sm:$0xff]
    %v121 = vld [vmem:[#allocation2 + $0x208] sm:$0xff]
    %v122 = vld [vmem:[#allocation2 + $0x210] sm:$0xff]
    %v123 = vld [vmem:[#allocation2 + $0x218] sm:$0xff]
    %v124 = vld [vmem:[#allocation2 + $0x220] sm:$0xff]
    %v125 = vld [vmem:[#allocation2 + $0x228] sm:$0xff]
    %v126 = vld [vmem:[#allocation2 + $0x230] sm:$0xff]
    %v127 = vld [vmem:[#allocation2 + $0x238] sm:$0xff]
    %v128 = vld [vmem:[#allocation2 + $0x240] sm:$0xff]
    %v129 = vld [vmem:[#allocation2 + $0x248] sm:$0xff]
    %v130 = vld [vmem:[#allocation2 + $0x250] sm:$0xff]
    %v131 = vld [vmem:[#allocation2 + $0x258] sm:$0xff]
    %v132 = vld [vmem:[#allocation2 + $0x260] sm:$0xff]
    %v133 = vld [vmem:[#allocation2 + $0x268] sm:$0xff]
    %v134 = vld [vmem:[#allocation2 + $0x270] sm:$0xff]
    %v135 = vld [vmem:[#allocation2 + $0x278] sm:$0xff]
    %v136 = vld [vmem:[#allocation2 + $0x280] sm:$0xff]
    %v137 = vld [vmem:[#allocation2 + $0x288] sm:$0xff]
    %v138 = vld [vmem:[#allocation2 + $0x290] sm:$0xff]
    %v139 = vld [vmem:[#allocation2 + $0x298] sm:$0xff]
    %v140 = vld [vmem:[#allocation2 + $0x2a0] sm:$0xff]
    %v141 = vld [vmem:[#allocation2 + $0x2a8] sm:$0xff]
    %v142 = vld [vmem:[#allocation2 + $0x2b0] sm:$0xff]
    %v143 = vld [vmem:[#allocation2 + $0x2b8] sm:$0xff]
    %v144 = vld [vmem:[#allocation2 + $0x2c0] sm:$0xff]
    %v145 = vld [vmem:[#allocation2 + $0x2c8] sm:$0xff]
    %v146 = vld [vmem:[#allocation2 + $0x2d0] sm:$0xff]
    %v147 = vld [vmem:[#allocation2 + $0x2d8] sm:$0xff]
    %v148 = vld [vmem:[#allocation2 + $0x2e0] sm:$0xff]
    %v149 = vld [vmem:[#allocation2 + $0x2e8] sm:$0xff]
    %v150 = vld [vmem:[#allocation2 + $0x2f0] sm:$0xff]
    %v151 = vld [vmem:[#allocation2 + $0x2f8] sm:$0xff]
    %v152 = vld [vmem:[#allocation2 + $0x300] sm:$0xff]
    %v153 = vld [vmem:[#allocation2 + $0x308] sm:$0xff]
    %v154 = vld [vmem:[#allocation2 + $0x310] sm:$0xff]
    %v155 = vld [vmem:[#allocation2 + $0x318] sm:$0xff]
    %v156 = vld [vmem:[#allocation2 + $0x320] sm:$0xff]
    %v157 = vld [vmem:[#allocation2 + $0x328] sm:$0xff]
    %v158 = vld [vmem:[#allocation2 + $0x330] sm:$0xff]
    %v159 = vld [vmem:[#allocation2 + $0x338] sm:$0xff]
    %v160 = vld [vmem:[#allocation2 + $0x340] sm:$0xff]
    %v161 = vld [vmem:[#allocation2 + $0x348] sm:$0xff]
    %v162 = vld [vmem:[#allocation2 + $0x350] sm:$0xff]
    %v163 = vld [vmem:[#allocation2 + $0x358] sm:$0xff]
    %v164 = vld [vmem:[#allocation2 + $0x360] sm:$0xff]
    %v165 = vld [vmem:[#allocation2 + $0x368] sm:$0xff]
    %v166 = vld [vmem:[#allocation2 + $0x370] sm:$0xff]
    %v167 = vld [vmem:[#allocation2 + $0x378] sm:$0xff]
    %v168 = vld [vmem:[#allocation2 + $0x380] sm:$0xff]
    %v169 = vld [vmem:[#allocation2 + $0x388] sm:$0xff]
    %v170 = vld [vmem:[#allocation2 + $0x390] sm:$0xff]
    %v171 = vld [vmem:[#allocation2 + $0x398] sm:$0xff]
    %v172 = vld [vmem:[#allocation2 + $0x3a0] sm:$0xff]
    %v173 = vld [vmem:[#allocation2 + $0x3a8] sm:$0xff]
    %v174 = vld [vmem:[#allocation2 + $0x3b0] sm:$0xff]
    %v175 = vld [vmem:[#allocation2 + $0x3b8] sm:$0xff]
    %v176 = vld [vmem:[#allocation2 + $0x3c0] sm:$0xff]
    %v177 = vld [vmem:[#allocation2 + $0x3c8] sm:$0xff]
    %v178 = vld [vmem:[#allocation2 + $0x3d0] sm:$0xff]
    %v179 = vld [vmem:[#allocation2 + $0x3d8] sm:$0xff]
    %v180 = vld [vmem:[#allocation2 + $0x3e0] sm:$0xff]
    %v181 = vld [vmem:[#allocation2 + $0x3e8] sm:$0xff]
    %v182 = vld [vmem:[#allocation2 + $0x3f0] sm:$0xff]
    %v183 = vld [vmem:[#allocation2 + $0x3f8] sm:$0xff]
    %v184 = vld [vmem:[#allocation2 + $0x400] sm:$0xff]
    %v185 = vld [vmem:[#allocation2 + $0x408] sm:$0xff]
    %v186 = vld [vmem:[#allocation2 + $0x410] sm:$0xff]
    %v187 = vld [vmem:[#allocation2 + $0x418] sm:$0xff]
    %v188 = vld [vmem:[#allocation2 + $0x420] sm:$0xff]
    %v189 = vld [vmem:[#allocation2 + $0x428] sm:$0xff]
    %v190 = vld [vmem:[#allocation2 + $0x430] sm:$0xff]
    %v191 = vld [vmem:[#allocation2 + $0x438] sm:$0xff]
    %v192 = vld [vmem:[#allocation2 + $0x440] sm:$0xff]
    %v193 = vld [vmem:[#allocation2 + $0x448] sm:$0xff]
    %v194 = vld [vmem:[#allocation2 + $0x450] sm:$0xff]
    %v195 = vld [vmem:[#allocation2 + $0x458] sm:$0xff]
    %v196 = vld [vmem:[#allocation2 + $0x460] sm:$0xff]
    %v197 = vld [vmem:[#allocation2 + $0x468] sm:$0xff]
    %v198 = vld [vmem:[#allocation2 + $0x470] sm:$0xff]
    %v199 = vld [vmem:[#allocation2 + $0x478] sm:$0xff]
    %v200 = vld [vmem:[#allocation2 + $0x480] sm:$0xff]
    %v201 = vld [vmem:[#allocation2 + $0x488] sm:$0xff]
    %v202 = vld [vmem:[#allocation2 + $0x490] sm:$0xff]
    %v203 = vld [vmem:[#allocation2 + $0x498] sm:$0xff]
    %v204 = vld [vmem:[#allocation2 + $0x4a0] sm:$0xff]
    %v205 = vld [vmem:[#allocation2 + $0x4a8] sm:$0xff]
    %v206 = vld [vmem:[#allocation2 + $0x4b0] sm:$0xff]
    %v207 = vld [vmem:[#allocation2 + $0x4b8] sm:$0xff]
    %v208 = vld [vmem:[#allocation2 + $0x4c0] sm:$0xff]
    %v209 = vld [vmem:[#allocation2 + $0x4c8] sm:$0xff]
    %v210 = vld [vmem:[#allocation2 + $0x4d0] sm:$0xff]
    %v211 = vld [vmem:[#allocation2 + $0x4d8] sm:$0xff]
    %v212 = vld [vmem:[#allocation2 + $0x4e0] sm:$0xff]
    %v213 = vld [vmem:[#allocation2 + $0x4e8] sm:$0xff]
    %v214 = vld [vmem:[#allocation2 + $0x4f0] sm:$0xff]
    %v215 = vld [vmem:[#allocation2 + $0x4f8] sm:$0xff]
    %v216 = vld [vmem:[#allocation2 + $0x500] sm:$0xff]
    %v217 = vld [vmem:[#allocation2 + $0x508] sm:$0xff]
    %v218 = vld [vmem:[#allocation2 + $0x510] sm:$0xff]
    %v219 = vld [vmem:[#allocation2 + $0x518] sm:$0xff]
    %v220 = vld [vmem:[#allocation2 + $0x520] sm:$0xff]
    %v221 = vld [vmem:[#allocation2 + $0x528] sm:$0xff]
    %v222 = vld [vmem:[#allocation2 + $0x530] sm:$0xff]
    %v223 = vld [vmem:[#allocation2 + $0x538] sm:$0xff]
    %v224 = vld [vmem:[#allocation2 + $0x540] sm:$0xff]
    %v225 = vld [vmem:[#allocation2 + $0x548] sm:$0xff]
    %v226 = vld [vmem:[#allocation2 + $0x550] sm:$0xff]
    %v227 = vld [vmem:[#allocation2 + $0x558] sm:$0xff]
    %v228 = vld [vmem:[#allocation2 + $0x560] sm:$0xff]
    %v229 = vld [vmem:[#allocation2 + $0x568] sm:$0xff]
    %v230 = vld [vmem:[#allocation2 + $0x570] sm:$0xff]
    %v231 = vld [vmem:[#allocation2 + $0x578] sm:$0xff]
    %v232 = vld [vmem:[#allocation2 + $0x580] sm:$0xff]
    %v233 = vld [vmem:[#allocation2 + $0x588] sm:$0xff]
    %v234 = vld [vmem:[#allocation2 + $0x590] sm:$0xff]
    %v235 = vld [vmem:[#allocation2 + $0x598] sm:$0xff]
    %v236 = vld [vmem:[#allocation2 + $0x5a0] sm:$0xff]
    %v237 = vld [vmem:[#allocation2 + $0x5a8] sm:$0xff]
    %v238 = vld [vmem:[#allocation2 + $0x5b0] sm:$0xff]
    %v239 = vld [vmem:[#allocation2 + $0x5b8] sm:$0xff]
    %v240 = vld [vmem:[#allocation2 + $0x5c0] sm:$0xff]
    %v241 = vld [vmem:[#allocation2 + $0x5c8] sm:$0xff]
    %v242 = vld [vmem:[#allocation2 + $0x5d0] sm:$0xff]
    %v243 = vld [vmem:[#allocation2 + $0x5d8] sm:$0xff]
    %v244 = vld [vmem:[#allocation2 + $0x5e0] sm:$0xff]
    %v245 = vld [vmem:[#allocation2 + $0x5e8] sm:$0xff]
    %v246 = vld [vmem:[#allocation2 + $0x5f0] sm:$0xff]
    %v247 = vld [vmem:[#allocation2 + $0x5f8] sm:$0xff]
    %v248 = vld [vmem:[#allocation2 + $0x600] sm:$0xff]
    %v249 = vld [vmem:[#allocation2 + $0x608] sm:$0xff]
    %v250 = vld [vmem:[#allocation2 + $0x610] sm:$0xff]
    %v251 = vld [vmem:[#allocation2 + $0x618] sm:$0xff]
    %v252 = vld [vmem:[%s2] sm:$0xf]
    %v254 = vlaneseq
    %v255 = vshrl.u32 %v254, 7
    %v256 = vsub.s32 0, %v255
    %v257 = vrot.slane %v252, %v256
    %v258 = vlaneseq
    %v259 = vshrl.u32 %v258, 7
    %v260 = vsub.s32 1, %v259
    %v261 = vrot.slane %v252, %v260
    %v262 = vlaneseq
    %v263 = vshrl.u32 %v262, 7
    %v264 = vsub.s32 2, %v263
    %v265 = vrot.slane %v252, %v264
    %v266 = vlaneseq
    %v267 = vshrl.u32 %v266, 7
    %v268 = vsub.s32 3, %v267
    %v269 = vrot.slane %v252, %v268
    %v470 = vunpack.c.l.b16 %v56
    %v471 = vunpack.c.h.b16 %v56
    %v472 = vunpack.c.l.b16 %v57
    %v473 = vunpack.c.h.b16 %v57
    %v474 = vunpack.c.l.b16 %v58
    %v475 = vunpack.c.h.b16 %v58
    %v476 = vunpack.c.l.b16 %v59
    %v477 = vunpack.c.h.b16 %v59
    %v478 = vunpack.c.l.b16 %v60
    %v479 = vunpack.c.h.b16 %v60
    %v480 = vunpack.c.l.b16 %v61
    %v481 = vunpack.c.h.b16 %v61
    %v482 = vunpack.c.l.b16 %v62
    %v483 = vunpack.c.h.b16 %v62
    %v484 = vunpack.c.l.b16 %v63
    %v485 = vunpack.c.h.b16 %v63
    %v486 = vunpack.c.l.b16 %v64
    %v487 = vunpack.c.h.b16 %v64
    %v488 = vunpack.c.l.b16 %v65
    %v489 = vunpack.c.h.b16 %v65
    %v490 = vunpack.c.l.b16 %v66
    %v491 = vunpack.c.h.b16 %v66
    %v492 = vunpack.c.l.b16 %v67
    %v493 = vunpack.c.h.b16 %v67
    %v494 = vunpack.c.l.b16 %v68
    %v495 = vunpack.c.h.b16 %v68
    %v496 = vunpack.c.l.b16 %v69
    %v497 = vunpack.c.h.b16 %v69
    %v498 = vunpack.c.l.b16 %v70
    %v499 = vunpack.c.h.b16 %v70
    %v500 = vunpack.c.l.b16 %v71
    %v501 = vunpack.c.h.b16 %v71
    %v502 = vunpack.c.l.b16 %v72
    %v503 = vunpack.c.h.b16 %v72
    %v504 = vunpack.c.l.b16 %v73
    %v505 = vunpack.c.h.b16 %v73
    %v506 = vunpack.c.l.b16 %v74
    %v507 = vunpack.c.h.b16 %v74
    %v508 = vunpack.c.l.b16 %v75
    %v509 = vunpack.c.h.b16 %v75
    %v510 = vunpack.c.l.b16 %v76
    %v511 = vunpack.c.h.b16 %v76
    %v512 = vunpack.c.l.b16 %v77
    %v513 = vunpack.c.h.b16 %v77
    %v514 = vunpack.c.l.b16 %v78
    %v515 = vunpack.c.h.b16 %v78
    %v516 = vunpack.c.l.b16 %v79
    %v517 = vunpack.c.h.b16 %v79
    %v518 = vunpack.c.l.b16 %v80
    %v519 = vunpack.c.h.b16 %v80
    %v520 = vunpack.c.l.b16 %v81
    %v521 = vunpack.c.h.b16 %v81
    %v522 = vunpack.c.l.b16 %v82
    %v523 = vunpack.c.h.b16 %v82
    %v524 = vunpack.c.l.b16 %v83
    %v525 = vunpack.c.h.b16 %v83
    %v526 = vunpack.c.l.b16 %v84
    %v527 = vunpack.c.h.b16 %v84
    %v528 = vunpack.c.l.b16 %v85
    %v529 = vunpack.c.h.b16 %v85
    %v530 = vunpack.c.l.b16 %v86
    %v531 = vunpack.c.h.b16 %v86
    %v532 = vunpack.c.l.b16 %v87
    %v533 = vunpack.c.h.b16 %v87
    %v534 = vunpack.c.l.b16 %v88
    %v535 = vunpack.c.h.b16 %v88
    %v536 = vunpack.c.l.b16 %v89
    %v537 = vunpack.c.h.b16 %v89
    %v538 = vunpack.c.l.b16 %v90
    %v539 = vunpack.c.h.b16 %v90
    %v540 = vunpack.c.l.b16 %v91
    %v541 = vunpack.c.h.b16 %v91
    %v542 = vunpack.c.l.b16 %v92
    %v543 = vunpack.c.h.b16 %v92
    %v544 = vunpack.c.l.b16 %v93
    %v545 = vunpack.c.h.b16 %v93
    %v546 = vunpack.c.l.b16 %v94
    %v547 = vunpack.c.h.b16 %v94
    %v548 = vunpack.c.l.b16 %v95
    %v549 = vunpack.c.h.b16 %v95
    %v550 = vunpack.c.l.b16 %v96
    %v551 = vunpack.c.h.b16 %v96
    %v552 = vunpack.c.l.b16 %v97
    %v553 = vunpack.c.h.b16 %v97
    %v554 = vunpack.c.l.b16 %v98
    %v555 = vunpack.c.h.b16 %v98
    %v556 = vunpack.c.l.b16 %v99
    %v557 = vunpack.c.h.b16 %v99
    %v558 = vunpack.c.l.b16 %v100
    %v559 = vunpack.c.h.b16 %v100
    %v560 = vunpack.c.l.b16 %v101
    %v561 = vunpack.c.h.b16 %v101
    %v562 = vunpack.c.l.b16 %v102
    %v563 = vunpack.c.h.b16 %v102
    %v564 = vunpack.c.l.b16 %v103
    %v565 = vunpack.c.h.b16 %v103
    %v566 = vunpack.c.l.b16 %v104
    %v567 = vunpack.c.h.b16 %v104
    %v568 = vunpack.c.l.b16 %v105
    %v569 = vunpack.c.h.b16 %v105
    %v570 = vunpack.c.l.b16 %v106
    %v571 = vunpack.c.h.b16 %v106
    %v572 = vunpack.c.l.b16 %v107
    %v573 = vunpack.c.h.b16 %v107
    %v574 = vunpack.c.l.b16 %v108
    %v575 = vunpack.c.h.b16 %v108
    %v576 = vunpack.c.l.b16 %v109
    %v577 = vunpack.c.h.b16 %v109
    %v578 = vunpack.c.l.b16 %v110
    %v579 = vunpack.c.h.b16 %v110
    %v580 = vunpack.c.l.b16 %v111
    %v581 = vunpack.c.h.b16 %v111
    %v582 = vunpack.c.l.b16 %v112
    %v583 = vunpack.c.h.b16 %v112
    %v584 = vunpack.c.l.b16 %v113
    %v585 = vunpack.c.h.b16 %v113
    %v586 = vunpack.c.l.b16 %v114
    %v587 = vunpack.c.h.b16 %v114
    %v588 = vunpack.c.l.b16 %v115
    %v589 = vunpack.c.h.b16 %v115
    %v590 = vunpack.c.l.b16 %v116
    %v591 = vunpack.c.h.b16 %v116
    %v592 = vunpack.c.l.b16 %v117
    %v593 = vunpack.c.h.b16 %v117
    %v594 = vunpack.c.l.b16 %v118
    %v595 = vunpack.c.h.b16 %v118
    %v596 = vunpack.c.l.b16 %v119
    %v597 = vunpack.c.h.b16 %v119
    %v598 = vunpack.c.l.b16 %v120
    %v599 = vunpack.c.h.b16 %v120
    %v600 = vunpack.c.l.b16 %v121
    %v601 = vunpack.c.h.b16 %v121
    %v602 = vunpack.c.l.b16 %v122
    %v603 = vunpack.c.h.b16 %v122
    %v604 = vunpack.c.l.b16 %v123
    %v605 = vunpack.c.h.b16 %v123
    %v606 = vunpack.c.l.b16 %v124
    %v607 = vunpack.c.h.b16 %v124
    %v608 = vunpack.c.l.b16 %v125
    %v609 = vunpack.c.h.b16 %v125
    %v610 = vunpack.c.l.b16 %v126
    %v611 = vunpack.c.h.b16 %v126
    %v612 = vunpack.c.l.b16 %v127
    %v613 = vunpack.c.h.b16 %v127
    %v614 = vunpack.c.l.b16 %v128
    %v615 = vunpack.c.h.b16 %v128
    %v616 = vunpack.c.l.b16 %v129
    %v617 = vunpack.c.h.b16 %v129
    %v618 = vunpack.c.l.b16 %v130
    %v619 = vunpack.c.h.b16 %v130
    %v620 = vunpack.c.l.b16 %v131
    %v621 = vunpack.c.h.b16 %v131
    %v622 = vunpack.c.l.b16 %v132
    %v623 = vunpack.c.h.b16 %v132
    %v624 = vunpack.c.l.b16 %v133
    %v625 = vunpack.c.h.b16 %v133
    %v626 = vunpack.c.l.b16 %v134
    %v627 = vunpack.c.h.b16 %v134
    %v628 = vunpack.c.l.b16 %v135
    %v629 = vunpack.c.h.b16 %v135
    %v630 = vunpack.c.l.b16 %v136
    %v631 = vunpack.c.h.b16 %v136
    %v632 = vunpack.c.l.b16 %v137
    %v633 = vunpack.c.h.b16 %v137
    %v634 = vunpack.c.l.b16 %v138
    %v635 = vunpack.c.h.b16 %v138
    %v636 = vunpack.c.l.b16 %v139
    %v637 = vunpack.c.h.b16 %v139
    %v638 = vunpack.c.l.b16 %v140
    %v639 = vunpack.c.h.b16 %v140
    %v640 = vunpack.c.l.b16 %v141
    %v641 = vunpack.c.h.b16 %v141
    %v642 = vunpack.c.l.b16 %v142
    %v643 = vunpack.c.h.b16 %v142
    %v644 = vunpack.c.l.b16 %v143
    %v645 = vunpack.c.h.b16 %v143
    %v646 = vunpack.c.l.b16 %v144
    %v647 = vunpack.c.h.b16 %v144
    %v648 = vunpack.c.l.b16 %v145
    %v649 = vunpack.c.h.b16 %v145
    %v650 = vunpack.c.l.b16 %v146
    %v651 = vunpack.c.h.b16 %v146
    %v652 = vunpack.c.l.b16 %v147
    %v653 = vunpack.c.h.b16 %v147
    %v654 = vunpack.c.l.b16 %v148
    %v655 = vunpack.c.h.b16 %v148
    %v656 = vunpack.c.l.b16 %v149
    %v657 = vunpack.c.h.b16 %v149
    %v658 = vunpack.c.l.b16 %v150
    %v659 = vunpack.c.h.b16 %v150
    %v660 = vunpack.c.l.b16 %v151
    %v661 = vunpack.c.h.b16 %v151
    %v662 = vunpack.c.l.b16 %v152
    %v663 = vunpack.c.h.b16 %v152
    %v664 = vunpack.c.l.b16 %v153
    %v665 = vunpack.c.h.b16 %v153
    %v666 = vunpack.c.l.b16 %v154
    %v667 = vunpack.c.h.b16 %v154
    %v668 = vunpack.c.l.b16 %v155
    %v669 = vunpack.c.h.b16 %v155
    %v670 = vunpack.c.l.b16 %v156
    %v671 = vunpack.c.h.b16 %v156
    %v672 = vunpack.c.l.b16 %v157
    %v673 = vunpack.c.h.b16 %v157
    %v674 = vunpack.c.l.b16 %v158
    %v675 = vunpack.c.h.b16 %v158
    %v676 = vunpack.c.l.b16 %v159
    %v677 = vunpack.c.h.b16 %v159
    %v678 = vunpack.c.l.b16 %v160
    %v679 = vunpack.c.h.b16 %v160
    %v680 = vunpack.c.l.b16 %v161
    %v681 = vunpack.c.h.b16 %v161
    %v682 = vunpack.c.l.b16 %v162
    %v683 = vunpack.c.h.b16 %v162
    %v684 = vunpack.c.l.b16 %v163
    %v685 = vunpack.c.h.b16 %v163
    %v686 = vunpack.c.l.b16 %v164
    %v687 = vunpack.c.h.b16 %v164
    %v688 = vunpack.c.l.b16 %v165
    %v689 = vunpack.c.h.b16 %v165
    %v690 = vunpack.c.l.b16 %v166
    %v691 = vunpack.c.h.b16 %v166
    %v692 = vunpack.c.l.b16 %v167
    %v693 = vunpack.c.h.b16 %v167
    %v694 = vunpack.c.l.b16 %v168
    %v695 = vunpack.c.h.b16 %v168
    %v696 = vunpack.c.l.b16 %v169
    %v697 = vunpack.c.h.b16 %v169
    %v698 = vunpack.c.l.b16 %v170
    %v699 = vunpack.c.h.b16 %v170
    %v700 = vunpack.c.l.b16 %v171
    %v701 = vunpack.c.h.b16 %v171
    %v702 = vunpack.c.l.b16 %v172
    %v703 = vunpack.c.h.b16 %v172
    %v704 = vunpack.c.l.b16 %v173
    %v705 = vunpack.c.h.b16 %v173
    %v706 = vunpack.c.l.b16 %v174
    %v707 = vunpack.c.h.b16 %v174
    %v708 = vunpack.c.l.b16 %v175
    %v709 = vunpack.c.h.b16 %v175
    %v710 = vunpack.c.l.b16 %v176
    %v711 = vunpack.c.h.b16 %v176
    %v712 = vunpack.c.l.b16 %v177
    %v713 = vunpack.c.h.b16 %v177
    %v714 = vunpack.c.l.b16 %v178
    %v715 = vunpack.c.h.b16 %v178
    %v716 = vunpack.c.l.b16 %v179
    %v717 = vunpack.c.h.b16 %v179
    %v718 = vunpack.c.l.b16 %v180
    %v719 = vunpack.c.h.b16 %v180
    %v720 = vunpack.c.l.b16 %v181
    %v721 = vunpack.c.h.b16 %v181
    %v722 = vunpack.c.l.b16 %v182
    %v723 = vunpack.c.h.b16 %v182
    %v724 = vunpack.c.l.b16 %v183
    %v725 = vunpack.c.h.b16 %v183
    %v726 = vunpack.c.l.b16 %v184
    %v727 = vunpack.c.h.b16 %v184
    %v728 = vunpack.c.l.b16 %v185
    %v729 = vunpack.c.h.b16 %v185
    %v730 = vunpack.c.l.b16 %v186
    %v731 = vunpack.c.h.b16 %v186
    %v732 = vunpack.c.l.b16 %v187
    %v733 = vunpack.c.h.b16 %v187
    %v734 = vunpack.c.l.b16 %v188
    %v735 = vunpack.c.h.b16 %v188
    %v736 = vunpack.c.l.b16 %v189
    %v737 = vunpack.c.h.b16 %v189
    %v738 = vunpack.c.l.b16 %v190
    %v739 = vunpack.c.h.b16 %v190
    %v740 = vunpack.c.l.b16 %v191
    %v741 = vunpack.c.h.b16 %v191
    %v742 = vunpack.c.l.b16 %v192
    %v743 = vunpack.c.h.b16 %v192
    %v744 = vunpack.c.l.b16 %v193
    %v745 = vunpack.c.h.b16 %v193
    %v746 = vunpack.c.l.b16 %v194
    %v747 = vunpack.c.h.b16 %v194
    %v748 = vunpack.c.l.b16 %v195
    %v749 = vunpack.c.h.b16 %v195
    %v750 = vunpack.c.l.b16 %v196
    %v751 = vunpack.c.h.b16 %v196
    %v752 = vunpack.c.l.b16 %v197
    %v753 = vunpack.c.h.b16 %v197
    %v754 = vunpack.c.l.b16 %v198
    %v755 = vunpack.c.h.b16 %v198
    %v756 = vunpack.c.l.b16 %v199
    %v757 = vunpack.c.h.b16 %v199
    %v758 = vunpack.c.l.b16 %v200
    %v759 = vunpack.c.h.b16 %v200
    %v760 = vunpack.c.l.b16 %v201
    %v761 = vunpack.c.h.b16 %v201
    %v762 = vunpack.c.l.b16 %v202
    %v763 = vunpack.c.h.b16 %v202
    %v764 = vunpack.c.l.b16 %v203
    %v765 = vunpack.c.h.b16 %v203
    %v766 = vunpack.c.l.b16 %v204
    %v767 = vunpack.c.h.b16 %v204
    %v768 = vunpack.c.l.b16 %v205
    %v769 = vunpack.c.h.b16 %v205
    %v770 = vunpack.c.l.b16 %v206
    %v771 = vunpack.c.h.b16 %v206
    %v772 = vunpack.c.l.b16 %v207
    %v773 = vunpack.c.h.b16 %v207
    %v774 = vunpack.c.l.b16 %v208
    %v775 = vunpack.c.h.b16 %v208
    %v776 = vunpack.c.l.b16 %v209
    %v777 = vunpack.c.h.b16 %v209
    %v778 = vunpack.c.l.b16 %v210
    %v779 = vunpack.c.h.b16 %v210
    %v780 = vunpack.c.l.b16 %v211
    %v781 = vunpack.c.h.b16 %v211
    %v782 = vunpack.c.l.b16 %v212
    %v783 = vunpack.c.h.b16 %v212
    %v784 = vunpack.c.l.b16 %v213
    %v785 = vunpack.c.h.b16 %v213
    %v786 = vunpack.c.l.b16 %v214
    %v787 = vunpack.c.h.b16 %v214
    %v788 = vunpack.c.l.b16 %v215
    %v789 = vunpack.c.h.b16 %v215
    %v790 = vunpack.c.l.b16 %v216
    %v791 = vunpack.c.h.b16 %v216
    %v792 = vunpack.c.l.b16 %v217
    %v793 = vunpack.c.h.b16 %v217
    %v794 = vunpack.c.l.b16 %v218
    %v795 = vunpack.c.h.b16 %v218
    %v796 = vunpack.c.l.b16 %v219
    %v797 = vunpack.c.h.b16 %v219
    %v798 = vunpack.c.l.b16 %v220
    %v799 = vunpack.c.h.b16 %v220
    %v800 = vunpack.c.l.b16 %v221
    %v801 = vunpack.c.h.b16 %v221
    %v802 = vunpack.c.l.b16 %v222
    %v803 = vunpack.c.h.b16 %v222
    %v804 = vunpack.c.l.b16 %v223
    %v805 = vunpack.c.h.b16 %v223
    %v806 = vunpack.c.l.b16 %v224
    %v807 = vunpack.c.h.b16 %v224
    %v808 = vunpack.c.l.b16 %v225
    %v809 = vunpack.c.h.b16 %v225
    %v810 = vunpack.c.l.b16 %v226
    %v811 = vunpack.c.h.b16 %v226
    %v812 = vunpack.c.l.b16 %v227
    %v813 = vunpack.c.h.b16 %v227
    %v814 = vunpack.c.l.b16 %v228
    %v815 = vunpack.c.h.b16 %v228
    %v816 = vunpack.c.l.b16 %v229
    %v817 = vunpack.c.h.b16 %v229
    %v818 = vunpack.c.l.b16 %v230
    %v819 = vunpack.c.h.b16 %v230
    %v820 = vunpack.c.l.b16 %v231
    %v821 = vunpack.c.h.b16 %v231
    %v822 = vunpack.c.l.b16 %v232
    %v823 = vunpack.c.h.b16 %v232
    %v824 = vunpack.c.l.b16 %v233
    %v825 = vunpack.c.h.b16 %v233
    %v826 = vunpack.c.l.b16 %v234
    %v827 = vunpack.c.h.b16 %v234
    %v828 = vunpack.c.l.b16 %v235
    %v829 = vunpack.c.h.b16 %v235
    %v830 = vunpack.c.l.b16 %v236
    %v831 = vunpack.c.h.b16 %v236
    %v832 = vunpack.c.l.b16 %v237
    %v833 = vunpack.c.h.b16 %v237
    %v834 = vunpack.c.l.b16 %v238
    %v835 = vunpack.c.h.b16 %v238
    %v836 = vunpack.c.l.b16 %v239
    %v837 = vunpack.c.h.b16 %v239
    %v838 = vunpack.c.l.b16 %v240
    %v839 = vunpack.c.h.b16 %v240
    %v840 = vunpack.c.l.b16 %v241
    %v841 = vunpack.c.h.b16 %v241
    %v842 = vunpack.c.l.b16 %v242
    %v843 = vunpack.c.h.b16 %v242
    %v844 = vunpack.c.l.b16 %v243
    %v845 = vunpack.c.h.b16 %v243
    %v846 = vunpack.c.l.b16 %v244
    %v847 = vunpack.c.h.b16 %v244
    %v848 = vunpack.c.l.b16 %v245
    %v849 = vunpack.c.h.b16 %v245
    %v850 = vunpack.c.l.b16 %v246
    %v851 = vunpack.c.h.b16 %v246
    %v852 = vunpack.c.l.b16 %v247
    %v853 = vunpack.c.h.b16 %v247
    %v854 = vunpack.c.l.b16 %v248
    %v855 = vunpack.c.h.b16 %v248
    %v856 = vunpack.c.l.b16 %v249
    %v857 = vunpack.c.h.b16 %v249
    %v858 = vunpack.c.l.b16 %v250
    %v859 = vunpack.c.h.b16 %v250
    %v860 = vunpack.c.l.b16 %v251
    %v861 = vunpack.c.h.b16 %v251
    %v862 = vpack.c.b16 %v474, %v470
    %v863 = vpack.c.b16 %v475, %v471
    %v864 = vpack.c.b16 %v476, %v472
    %v865 = vpack.c.b16 %v477, %v473
    %v866 = vpack.c.b16 %v482, %v478
    %v867 = vpack.c.b16 %v483, %v479
    %v868 = vpack.c.b16 %v484, %v480
    %v869 = vpack.c.b16 %v485, %v481
    %v870 = vpack.c.b16 %v490, %v486
    %v871 = vpack.c.b16 %v491, %v487
    %v872 = vpack.c.b16 %v492, %v488
    %v873 = vpack.c.b16 %v493, %v489
    %v874 = vpack.c.b16 %v498, %v494
    %v875 = vpack.c.b16 %v499, %v495
    %v876 = vpack.c.b16 %v500, %v496
    %v877 = vpack.c.b16 %v501, %v497
    %v878 = vpack.c.b16 %v506, %v502
    %v879 = vpack.c.b16 %v507, %v503
    %v880 = vpack.c.b16 %v508, %v504
    %v881 = vpack.c.b16 %v509, %v505
    %v882 = vpack.c.b16 %v514, %v510
    %v883 = vpack.c.b16 %v515, %v511
    %v884 = vpack.c.b16 %v516, %v512
    %v885 = vpack.c.b16 %v517, %v513
    %v886 = vpack.c.b16 %v522, %v518
    %v887 = vpack.c.b16 %v523, %v519
    %v888 = vpack.c.b16 %v524, %v520
    %v889 = vpack.c.b16 %v525, %v521
    %v890 = vpack.c.b16 %v530, %v526
    %v891 = vpack.c.b16 %v531, %v527
    %v892 = vpack.c.b16 %v532, %v528
    %v893 = vpack.c.b16 %v533, %v529
    %v894 = vpack.c.b16 %v538, %v534
    %v895 = vpack.c.b16 %v539, %v535
    %v896 = vpack.c.b16 %v540, %v536
    %v897 = vpack.c.b16 %v541, %v537
    %v898 = vpack.c.b16 %v546, %v542
    %v899 = vpack.c.b16 %v547, %v543
    %v900 = vpack.c.b16 %v548, %v544
    %v901 = vpack.c.b16 %v549, %v545
    %v902 = vpack.c.b16 %v554, %v550
    %v903 = vpack.c.b16 %v555, %v551
    %v904 = vpack.c.b16 %v556, %v552
    %v905 = vpack.c.b16 %v557, %v553
    %v906 = vpack.c.b16 %v562, %v558
    %v907 = vpack.c.b16 %v563, %v559
    %v908 = vpack.c.b16 %v564, %v560
    %v909 = vpack.c.b16 %v565, %v561
    %v910 = vpack.c.b16 %v570, %v566
    %v911 = vpack.c.b16 %v571, %v567
    %v912 = vpack.c.b16 %v572, %v568
    %v913 = vpack.c.b16 %v573, %v569
    %v914 = vpack.c.b16 %v578, %v574
    %v915 = vpack.c.b16 %v579, %v575
    %v916 = vpack.c.b16 %v580, %v576
    %v917 = vpack.c.b16 %v581, %v577
    %v918 = vpack.c.b16 %v586, %v582
    %v919 = vpack.c.b16 %v587, %v583
    %v920 = vpack.c.b16 %v588, %v584
    %v921 = vpack.c.b16 %v589, %v585
    %v922 = vpack.c.b16 %v594, %v590
    %v923 = vpack.c.b16 %v595, %v591
    %v924 = vpack.c.b16 %v596, %v592
    %v925 = vpack.c.b16 %v597, %v593
    %v926 = vpack.c.b16 %v602, %v598
    %v927 = vpack.c.b16 %v603, %v599
    %v928 = vpack.c.b16 %v604, %v600
    %v929 = vpack.c.b16 %v605, %v601
    %v930 = vpack.c.b16 %v610, %v606
    %v931 = vpack.c.b16 %v611, %v607
    %v932 = vpack.c.b16 %v612, %v608
    %v933 = vpack.c.b16 %v613, %v609
    %v934 = vpack.c.b16 %v618, %v614
    %v935 = vpack.c.b16 %v619, %v615
    %v936 = vpack.c.b16 %v620, %v616
    %v937 = vpack.c.b16 %v621, %v617
    %v938 = vpack.c.b16 %v626, %v622
    %v939 = vpack.c.b16 %v627, %v623
    %v940 = vpack.c.b16 %v628, %v624
    %v941 = vpack.c.b16 %v629, %v625
    %v942 = vpack.c.b16 %v634, %v630
    %v943 = vpack.c.b16 %v635, %v631
    %v944 = vpack.c.b16 %v636, %v632
    %v945 = vpack.c.b16 %v637, %v633
    %v946 = vpack.c.b16 %v642, %v638
    %v947 = vpack.c.b16 %v643, %v639
    %v948 = vpack.c.b16 %v644, %v640
    %v949 = vpack.c.b16 %v645, %v641
    %v950 = vpack.c.b16 %v650, %v646
    %v951 = vpack.c.b16 %v651, %v647
    %v952 = vpack.c.b16 %v652, %v648
    %v953 = vpack.c.b16 %v653, %v649
    %v954 = vpack.c.b16 %v658, %v654
    %v955 = vpack.c.b16 %v659, %v655
    %v956 = vpack.c.b16 %v660, %v656
    %v957 = vpack.c.b16 %v661, %v657
    %v958 = vpack.c.b16 %v666, %v662
    %v959 = vpack.c.b16 %v667, %v663
    %v960 = vpack.c.b16 %v668, %v664
    %v961 = vpack.c.b16 %v669, %v665
    %v962 = vpack.c.b16 %v674, %v670
    %v963 = vpack.c.b16 %v675, %v671
    %v964 = vpack.c.b16 %v676, %v672
    %v965 = vpack.c.b16 %v677, %v673
    %v966 = vpack.c.b16 %v682, %v678
    %v967 = vpack.c.b16 %v683, %v679
    %v968 = vpack.c.b16 %v684, %v680
    %v969 = vpack.c.b16 %v685, %v681
    %v970 = vpack.c.b16 %v690, %v686
    %v971 = vpack.c.b16 %v691, %v687
    %v972 = vpack.c.b16 %v692, %v688
    %v973 = vpack.c.b16 %v693, %v689
    %v974 = vpack.c.b16 %v698, %v694
    %v975 = vpack.c.b16 %v699, %v695
    %v976 = vpack.c.b16 %v700, %v696
    %v977 = vpack.c.b16 %v701, %v697
    %v978 = vpack.c.b16 %v706, %v702
    %v979 = vpack.c.b16 %v707, %v703
    %v980 = vpack.c.b16 %v708, %v704
    %v981 = vpack.c.b16 %v709, %v705
    %v982 = vpack.c.b16 %v714, %v710
    %v983 = vpack.c.b16 %v715, %v711
    %v984 = vpack.c.b16 %v716, %v712
    %v985 = vpack.c.b16 %v717, %v713
    %v986 = vpack.c.b16 %v722, %v718
    %v987 = vpack.c.b16 %v723, %v719
    %v988 = vpack.c.b16 %v724, %v720
    %v989 = vpack.c.b16 %v725, %v721
    %v990 = vpack.c.b16 %v730, %v726
    %v991 = vpack.c.b16 %v731, %v727
    %v992 = vpack.c.b16 %v732, %v728
    %v993 = vpack.c.b16 %v733, %v729
    %v994 = vpack.c.b16 %v738, %v734
    %v995 = vpack.c.b16 %v739, %v735
    %v996 = vpack.c.b16 %v740, %v736
    %v997 = vpack.c.b16 %v741, %v737
    %v998 = vpack.c.b16 %v746, %v742
    %v999 = vpack.c.b16 %v747, %v743
    %v1000 = vpack.c.b16 %v748, %v744
    %v1001 = vpack.c.b16 %v749, %v745
    %v1002 = vpack.c.b16 %v754, %v750
    %v1003 = vpack.c.b16 %v755, %v751
    %v1004 = vpack.c.b16 %v756, %v752
    %v1005 = vpack.c.b16 %v757, %v753
    %v1006 = vpack.c.b16 %v762, %v758
    %v1007 = vpack.c.b16 %v763, %v759
    %v1008 = vpack.c.b16 %v764, %v760
    %v1009 = vpack.c.b16 %v765, %v761
    %v1010 = vpack.c.b16 %v770, %v766
    %v1011 = vpack.c.b16 %v771, %v767
    %v1012 = vpack.c.b16 %v772, %v768
    %v1013 = vpack.c.b16 %v773, %v769
    %v1014 = vpack.c.b16 %v778, %v774
    %v1015 = vpack.c.b16 %v779, %v775
    %v1016 = vpack.c.b16 %v780, %v776
    %v1017 = vpack.c.b16 %v781, %v777
    %v1018 = vpack.c.b16 %v786, %v782
    %v1019 = vpack.c.b16 %v787, %v783
    %v1020 = vpack.c.b16 %v788, %v784
    %v1021 = vpack.c.b16 %v789, %v785
    %v1022 = vpack.c.b16 %v794, %v790
    %v1023 = vpack.c.b16 %v795, %v791
    %v1024 = vpack.c.b16 %v796, %v792
    %v1025 = vpack.c.b16 %v797, %v793
    %v1026 = vpack.c.b16 %v802, %v798
    %v1027 = vpack.c.b16 %v803, %v799
    %v1028 = vpack.c.b16 %v804, %v800
    %v1029 = vpack.c.b16 %v805, %v801
    %v1030 = vpack.c.b16 %v810, %v806
    %v1031 = vpack.c.b16 %v811, %v807
    %v1032 = vpack.c.b16 %v812, %v808
    %v1033 = vpack.c.b16 %v813, %v809
    %v1034 = vpack.c.b16 %v818, %v814
    %v1035 = vpack.c.b16 %v819, %v815
    %v1036 = vpack.c.b16 %v820, %v816
    %v1037 = vpack.c.b16 %v821, %v817
    %v1038 = vpack.c.b16 %v826, %v822
    %v1039 = vpack.c.b16 %v827, %v823
    %v1040 = vpack.c.b16 %v828, %v824
    %v1041 = vpack.c.b16 %v829, %v825
    %v1042 = vpack.c.b16 %v834, %v830
    %v1043 = vpack.c.b16 %v835, %v831
    %v1044 = vpack.c.b16 %v836, %v832
    %v1045 = vpack.c.b16 %v837, %v833
    %v1046 = vpack.c.b16 %v842, %v838
    %v1047 = vpack.c.b16 %v843, %v839
    %v1048 = vpack.c.b16 %v844, %v840
    %v1049 = vpack.c.b16 %v845, %v841
    %v1050 = vpack.c.b16 %v850, %v846
    %v1051 = vpack.c.b16 %v851, %v847
    %v1052 = vpack.c.b16 %v852, %v848
    %v1053 = vpack.c.b16 %v853, %v849
    %v1054 = vpack.c.b16 %v858, %v854
    %v1055 = vpack.c.b16 %v859, %v855
    %v1056 = vpack.c.b16 %v860, %v856
    %v1057 = vpack.c.b16 %v861, %v857
    %vm1254 = vcmask 130048
    %v1256 = vsel %vm1254, %v55, 0
    %1258 = vmatprep.subr.bf16.mxu0 %v863
    %1259 = vmatpush1.bf16.msra.mxu0 %v862
    %1260 = vmatprep.subr.bf16.mxu0 %v867
    %1261 = vmatpush1.bf16.msra.mxu0 %v866
    %1262 = vmatprep.subr.bf16.mxu0 %v871
    %1263 = vmatpush1.bf16.msra.mxu0 %v870
    %1264 = vmatprep.subr.bf16.mxu0 %v875
    %1265 = vmatpush1.bf16.msra.mxu0 %v874
    %1266 = vmatprep.subr.bf16.mxu0 %v879
    %1267 = vmatpush1.bf16.msra.mxu0 %v878
    %1268 = vmatprep.subr.bf16.mxu0 %v883
    %1269 = vmatpush1.bf16.msra.mxu0 %v882
    %1270 = vmatprep.subr.bf16.mxu0 %v887
    %1271 = vmatpush1.bf16.msra.mxu0 %v886
    %1272 = vmatprep.subr.bf16.mxu0 %v891
    %1273 = vmatpush1.bf16.msra.mxu0 %v890
    %1274 = vmatprep.subr.bf16.mxu0 %v895
    %1275 = vmatpush1.bf16.msra.mxu0 %v894
    %1276 = vmatprep.subr.bf16.mxu0 %v899
    %1277 = vmatpush1.bf16.msra.mxu0 %v898
    %1278 = vmatprep.subr.bf16.mxu0 %v903
    %1279 = vmatpush1.bf16.msra.mxu0 %v902
    %1280 = vmatprep.subr.bf16.mxu0 %v907
    %1281 = vmatpush1.bf16.msra.mxu0 %v906
    %1282 = vmatprep.subr.bf16.mxu0 %v911
    %1283 = vmatpush1.bf16.msra.mxu0 %v910
    %1284 = vmatprep.subr.bf16.mxu0 %v915
    %1285 = vmatpush1.bf16.msra.mxu0 %v914
    %1286 = vmatprep.subr.bf16.mxu0 %v919
    %1287 = vmatpush1.bf16.msra.mxu0 %v918
    %1288 = vmatprep.subr.bf16.mxu0 %v923
    %1289 = vmatpush1.bf16.msra.mxu0 %v922
    %1290 = vmatprep.mubr.bf16.mxu0 %v50
    %1291 = vmatmul.mubr.bf16.gmra.mrb[0].mxu0 %v49
    %v1292 = vpop.f32.mrb[0].mxu0
    %v1293 = vadd.f32 %v257, %v1292
    %v1294 = vpop.f32.mrb[0].mxu0
    %v1295 = vadd.f32 %v261, %v1294
    %v1296 = vpop.f32.mrb[0].mxu0
    %v1297 = vpop.f32.mrb[0].mxu0
    %1298 = vdwg.mxu0
    %1299 = vmatprep.subr.bf16.mxu0 %v927
    %1300 = vmatpush1.bf16.msra.mxu0 %v926
    %1301 = vmatprep.subr.bf16.mxu0 %v931
    %1302 = vmatpush1.bf16.msra.mxu0 %v930
    %1303 = vmatprep.subr.bf16.mxu0 %v935
    %1304 = vmatpush1.bf16.msra.mxu0 %v934
    %1305 = vmatprep.subr.bf16.mxu0 %v939
    %1306 = vmatpush1.bf16.msra.mxu0 %v938
    %1307 = vmatprep.subr.bf16.mxu0 %v943
    %1308 = vmatpush1.bf16.msra.mxu0 %v942
    %1309 = vmatprep.subr.bf16.mxu0 %v947
    %1310 = vmatpush1.bf16.msra.mxu0 %v946
    %1311 = vmatprep.subr.bf16.mxu0 %v951
    %1312 = vmatpush1.bf16.msra.mxu0 %v950
    %1313 = vmatprep.subr.bf16.mxu0 %v955
    %1314 = vmatpush1.bf16.msra.mxu0 %v954
    %1315 = vmatprep.subr.bf16.mxu0 %v959
    %1316 = vmatpush1.bf16.msra.mxu0 %v958
    %1317 = vmatprep.subr.bf16.mxu0 %v963
    %1318 = vmatpush1.bf16.msra.mxu0 %v962
    %1319 = vmatprep.subr.bf16.mxu0 %v967
    %1320 = vmatpush1.bf16.msra.mxu0 %v966
    %1321 = vmatprep.subr.bf16.mxu0 %v971
    %1322 = vmatpush1.bf16.msra.mxu0 %v970
    %1323 = vmatprep.subr.bf16.mxu0 %v975
    %1324 = vmatpush1.bf16.msra.mxu0 %v974
    %1325 = vmatprep.subr.bf16.mxu0 %v979
    %1326 = vmatpush1.bf16.msra.mxu0 %v978
    %1327 = vmatprep.subr.bf16.mxu0 %v983
    %1328 = vmatpush1.bf16.msra.mxu0 %v982
    %1329 = vmatprep.subr.bf16.mxu0 %v987
    %1330 = vmatpush1.bf16.msra.mxu0 %v986
    %1331 = vmatprep.mubr.bf16.mxu0 %v52
    %1332 = vmatmul.mubr.bf16.gmra.mrb[0].mxu0 %v51
    %v1333 = vpop.f32.mrb[0].mxu0
    %v1334 = vadd.f32 %v1293, %v1333
    %v1335 = vpop.f32.mrb[0].mxu0
    %v1336 = vadd.f32 %v1295, %v1335
    %v1337 = vpop.f32.mrb[0].mxu0
    %v1338 = vpop.f32.mrb[0].mxu0
    %1339 = vdwg.mxu0
    %1340 = vmatprep.subr.bf16.mxu0 %v991
    %1341 = vmatpush1.bf16.msra.mxu0 %v990
    %1342 = vmatprep.subr.bf16.mxu0 %v995
    %1343 = vmatpush1.bf16.msra.mxu0 %v994
    %1344 = vmatprep.subr.bf16.mxu0 %v999
    %1345 = vmatpush1.bf16.msra.mxu0 %v998
    %1346 = vmatprep.subr.bf16.mxu0 %v1003
    %1347 = vmatpush1.bf16.msra.mxu0 %v1002
    %1348 = vmatprep.subr.bf16.mxu0 %v1007
    %1349 = vmatpush1.bf16.msra.mxu0 %v1006
    %1350 = vmatprep.subr.bf16.mxu0 %v1011
    %1351 = vmatpush1.bf16.msra.mxu0 %v1010
    %1352 = vmatprep.subr.bf16.mxu0 %v1015
    %1353 = vmatpush1.bf16.msra.mxu0 %v1014
    %1354 = vmatprep.subr.bf16.mxu0 %v1019
    %1355 = vmatpush1.bf16.msra.mxu0 %v1018
    %1356 = vmatprep.subr.bf16.mxu0 %v1023
    %1357 = vmatpush1.bf16.msra.mxu0 %v1022
    %1358 = vmatprep.subr.bf16.mxu0 %v1027
    %1359 = vmatpush1.bf16.msra.mxu0 %v1026
    %1360 = vmatprep.subr.bf16.mxu0 %v1031
    %1361 = vmatpush1.bf16.msra.mxu0 %v1030
    %1362 = vmatprep.subr.bf16.mxu0 %v1035
    %1363 = vmatpush1.bf16.msra.mxu0 %v1034
    %1364 = vmatprep.subr.bf16.mxu0 %v1039
    %1365 = vmatpush1.bf16.msra.mxu0 %v1038
    %1366 = vmatprep.subr.bf16.mxu0 %v1043
    %1367 = vmatpush1.bf16.msra.mxu0 %v1042
    %1368 = vmatprep.subr.bf16.mxu0 %v1047
    %1369 = vmatpush1.bf16.msra.mxu0 %v1046
    %1370 = vmatprep.subr.bf16.mxu0 %v1051
    %1371 = vmatpush1.bf16.msra.mxu0 %v1050
    %1372 = vmatprep.mubr.bf16.mxu0 %v54
    %1373 = vmatmul.mubr.bf16.gmra.mrb[0].mxu0 %v53
    %v1374 = vpop.f32.mrb[0].mxu0
    %v1375 = vadd.f32 %v1334, %v1374
    %v1376 = vpop.f32.mrb[0].mxu0
    %v1377 = vadd.f32 %v1336, %v1376
    %v1378 = vpop.f32.mrb[0].mxu0
    %v1379 = vpop.f32.mrb[0].mxu0
    %1380 = vdwg.mxu0
    %1381 = vmatprep.subr.bf16.mxu0 %v1055
    %1382 = vmatpush1.bf16.msra.mxu0 %v1054
    %1383 = vmatprep.subr.bf16.mxu0 0
    %1384 = vmatpush1.bf16.msra.mxu0 0
    %1385 = vmatprep.subr.bf16.mxu0 0
    %1386 = vmatpush1.bf16.msra.mxu0 0
    %1387 = vmatprep.subr.bf16.mxu0 0
    %1388 = vmatpush1.bf16.msra.mxu0 0
    %1389 = vmatprep.subr.bf16.mxu0 0
    %1390 = vmatpush1.bf16.msra.mxu0 0
    %1391 = vmatprep.subr.bf16.mxu0 0
    %1392 = vmatpush1.bf16.msra.mxu0 0
    %1393 = vmatprep.subr.bf16.mxu0 0
    %1394 = vmatpush1.bf16.msra.mxu0 0
    %1395 = vmatprep.subr.bf16.mxu0 0
    %1396 = vmatpush1.bf16.msra.mxu0 0
    %1397 = vmatprep.subr.bf16.mxu0 0
    %1398 = vmatpush1.bf16.msra.mxu0 0
    %1399 = vmatprep.subr.bf16.mxu0 0
    %1400 = vmatpush1.bf16.msra.mxu0 0
    %1401 = vmatprep.subr.bf16.mxu0 0
    %1402 = vmatpush1.bf16.msra.mxu0 0
    %1403 = vmatprep.subr.bf16.mxu0 0
    %1404 = vmatpush1.bf16.msra.mxu0 0
    %1405 = vmatprep.subr.bf16.mxu0 0
    %1406 = vmatpush1.bf16.msra.mxu0 0
    %1407 = vmatprep.subr.bf16.mxu0 0
    %1408 = vmatpush1.bf16.msra.mxu0 0
    %1409 = vmatprep.subr.bf16.mxu0 0
    %1410 = vmatpush1.bf16.msra.mxu0 0
    %1411 = vmatprep.subr.bf16.mxu0 0
    %1412 = vmatpush1.bf16.msra.mxu0 0
    %1413 = vmatprep.mubr.bf16.mxu0 0
    %1414 = vmatmul.mubr.bf16.gmra.mrb[0].mxu0 %v1256
    %v1415 = vpop.f32.mrb[0].mxu0
    %v1416 = vadd.f32 %v1375, %v1415
    %v1417 = vpop.f32.mrb[0].mxu0
    %v1418 = vadd.f32 %v1377, %v1417
    %v1419 = vpop.f32.mrb[0].mxu0
    %v1420 = vpop.f32.mrb[0].mxu0
    %1421 = vdwg.mxu0
    %1422 = vmatprep.subr.bf16.mxu0 %v865
    %1423 = vmatpush1.bf16.msra.mxu0 %v864
    %1424 = vmatprep.subr.bf16.mxu0 %v869
    %1425 = vmatpush1.bf16.msra.mxu0 %v868
    %1426 = vmatprep.subr.bf16.mxu0 %v873
    %1427 = vmatpush1.bf16.msra.mxu0 %v872
    %1428 = vmatprep.subr.bf16.mxu0 %v877
    %1429 = vmatpush1.bf16.msra.mxu0 %v876
    %1430 = vmatprep.subr.bf16.mxu0 %v881
    %1431 = vmatpush1.bf16.msra.mxu0 %v880
    %1432 = vmatprep.subr.bf16.mxu0 %v885
    %1433 = vmatpush1.bf16.msra.mxu0 %v884
    %1434 = vmatprep.subr.bf16.mxu0 %v889
    %1435 = vmatpush1.bf16.msra.mxu0 %v888
    %1436 = vmatprep.subr.bf16.mxu0 %v893
    %1437 = vmatpush1.bf16.msra.mxu0 %v892
    %1438 = vmatprep.subr.bf16.mxu0 %v897
    %1439 = vmatpush1.bf16.msra.mxu0 %v896
    %1440 = vmatprep.subr.bf16.mxu0 %v901
    %1441 = vmatpush1.bf16.msra.mxu0 %v900
    %1442 = vmatprep.subr.bf16.mxu0 %v905
    %1443 = vmatpush1.bf16.msra.mxu0 %v904
    %1444 = vmatprep.subr.bf16.mxu0 %v909
    %1445 = vmatpush1.bf16.msra.mxu0 %v908
    %1446 = vmatprep.subr.bf16.mxu0 %v913
    %1447 = vmatpush1.bf16.msra.mxu0 %v912
    %1448 = vmatprep.subr.bf16.mxu0 %v917
    %1449 = vmatpush1.bf16.msra.mxu0 %v916
    %1450 = vmatprep.subr.bf16.mxu0 %v921
    %1451 = vmatpush1.bf16.msra.mxu0 %v920
    %1452 = vmatprep.subr.bf16.mxu0 %v925
    %1453 = vmatpush1.bf16.msra.mxu0 %v924
    %1454 = vmatprep.mubr.bf16.mxu0 %v50
    %1455 = vmatmul.mubr.bf16.gmra.mrb[0].mxu0 %v49
    %v1456 = vpop.f32.mrb[0].mxu0
    %v1457 = vadd.f32 %v265, %v1456
    %v1458 = vpop.f32.mrb[0].mxu0
    %v1459 = vadd.f32 %v269, %v1458
    %v1460 = vpop.f32.mrb[0].mxu0
    %v1461 = vpop.f32.mrb[0].mxu0
    %1462 = vdwg.mxu0
    %1463 = vmatprep.subr.bf16.mxu0 %v929
    %1464 = vmatpush1.bf16.msra.mxu0 %v928
    %1465 = vmatprep.subr.bf16.mxu0 %v933
    %1466 = vmatpush1.bf16.msra.mxu0 %v932
    %1467 = vmatprep.subr.bf16.mxu0 %v937
    %1468 = vmatpush1.bf16.msra.mxu0 %v936
    %1469 = vmatprep.subr.bf16.mxu0 %v941
    %1470 = vmatpush1.bf16.msra.mxu0 %v940
    %1471 = vmatprep.subr.bf16.mxu0 %v945
    %1472 = vmatpush1.bf16.msra.mxu0 %v944
    %1473 = vmatprep.subr.bf16.mxu0 %v949
    %1474 = vmatpush1.bf16.msra.mxu0 %v948
    %1475 = vmatprep.subr.bf16.mxu0 %v953
    %1476 = vmatpush1.bf16.msra.mxu0 %v952
    %1477 = vmatprep.subr.bf16.mxu0 %v957
    %1478 = vmatpush1.bf16.msra.mxu0 %v956
    %1479 = vmatprep.subr.bf16.mxu0 %v961
    %1480 = vmatpush1.bf16.msra.mxu0 %v960
    %1481 = vmatprep.subr.bf16.mxu0 %v965
    %1482 = vmatpush1.bf16.msra.mxu0 %v964
    %1483 = vmatprep.subr.bf16.mxu0 %v969
    %1484 = vmatpush1.bf16.msra.mxu0 %v968
    %1485 = vmatprep.subr.bf16.mxu0 %v973
    %1486 = vmatpush1.bf16.msra.mxu0 %v972
    %1487 = vmatprep.subr.bf16.mxu0 %v977
    %1488 = vmatpush1.bf16.msra.mxu0 %v976
    %1489 = vmatprep.subr.bf16.mxu0 %v981
    %1490 = vmatpush1.bf16.msra.mxu0 %v980
    %1491 = vmatprep.subr.bf16.mxu0 %v985
    %1492 = vmatpush1.bf16.msra.mxu0 %v984
    %1493 = vmatprep.subr.bf16.mxu0 %v989
    %1494 = vmatpush1.bf16.msra.mxu0 %v988
    %1495 = vmatprep.mubr.bf16.mxu0 %v52
    %1496 = vmatmul.mubr.bf16.gmra.mrb[0].mxu0 %v51
    %v1497 = vpop.f32.mrb[0].mxu0
    %v1498 = vadd.f32 %v1457, %v1497
    %v1499 = vpop.f32.mrb[0].mxu0
    %v1500 = vadd.f32 %v1459, %v1499
    %v1501 = vpop.f32.mrb[0].mxu0
    %v1502 = vpop.f32.mrb[0].mxu0
    %1503 = vdwg.mxu0
    %1504 = vmatprep.subr.bf16.mxu0 %v993
    %1505 = vmatpush1.bf16.msra.mxu0 %v992
    %1506 = vmatprep.subr.bf16.mxu0 %v997
    %1507 = vmatpush1.bf16.msra.mxu0 %v996
    %1508 = vmatprep.subr.bf16.mxu0 %v1001
    %1509 = vmatpush1.bf16.msra.mxu0 %v1000
    %1510 = vmatprep.subr.bf16.mxu0 %v1005
    %1511 = vmatpush1.bf16.msra.mxu0 %v1004
    %1512 = vmatprep.subr.bf16.mxu0 %v1009
    %1513 = vmatpush1.bf16.msra.mxu0 %v1008
    %1514 = vmatprep.subr.bf16.mxu0 %v1013
    %1515 = vmatpush1.bf16.msra.mxu0 %v1012
    %1516 = vmatprep.subr.bf16.mxu0 %v1017
    %1517 = vmatpush1.bf16.msra.mxu0 %v1016
    %1518 = vmatprep.subr.bf16.mxu0 %v1021
    %1519 = vmatpush1.bf16.msra.mxu0 %v1020
    %1520 = vmatprep.subr.bf16.mxu0 %v1025
    %1521 = vmatpush1.bf16.msra.mxu0 %v1024
    %1522 = vmatprep.subr.bf16.mxu0 %v1029
    %1523 = vmatpush1.bf16.msra.mxu0 %v1028
    %1524 = vmatprep.subr.bf16.mxu0 %v1033
    %1525 = vmatpush1.bf16.msra.mxu0 %v1032
    %1526 = vmatprep.subr.bf16.mxu0 %v1037
    %1527 = vmatpush1.bf16.msra.mxu0 %v1036
    %1528 = vmatprep.subr.bf16.mxu0 %v1041
    %1529 = vmatpush1.bf16.msra.mxu0 %v1040
    %1530 = vmatprep.subr.bf16.mxu0 %v1045
    %1531 = vmatpush1.bf16.msra.mxu0 %v1044
    %1532 = vmatprep.subr.bf16.mxu0 %v1049
    %1533 = vmatpush1.bf16.msra.mxu0 %v1048
    %1534 = vmatprep.subr.bf16.mxu0 %v1053
    %1535 = vmatpush1.bf16.msra.mxu0 %v1052
    %1536 = vmatprep.mubr.bf16.mxu0 %v54
    %1537 = vmatmul.mubr.bf16.gmra.mrb[0].mxu0 %v53
    %v1538 = vpop.f32.mrb[0].mxu0
    %v1539 = vadd.f32 %v1498, %v1538
    %v1540 = vpop.f32.mrb[0].mxu0
    %v1541 = vadd.f32 %v1500, %v1540
    %v1542 = vpop.f32.mrb[0].mxu0
    %v1543 = vpop.f32.mrb[0].mxu0
    %1544 = vdwg.mxu0
    %1545 = vmatprep.subr.bf16.mxu0 %v1057
    %1546 = vmatpush1.bf16.msra.mxu0 %v1056
    %1547 = vmatprep.subr.bf16.mxu0 0
    %1548 = vmatpush1.bf16.msra.mxu0 0
    %1549 = vmatprep.subr.bf16.mxu0 0
    %1550 = vmatpush1.bf16.msra.mxu0 0
    %1551 = vmatprep.subr.bf16.mxu0 0
    %1552 = vmatpush1.bf16.msra.mxu0 0
    %1553 = vmatprep.subr.bf16.mxu0 0
    %1554 = vmatpush1.bf16.msra.mxu0 0
    %1555 = vmatprep.subr.bf16.mxu0 0
    %1556 = vmatpush1.bf16.msra.mxu0 0
    %1557 = vmatprep.subr.bf16.mxu0 0
    %1558 = vmatpush1.bf16.msra.mxu0 0
    %1559 = vmatprep.subr.bf16.mxu0 0
    %1560 = vmatpush1.bf16.msra.mxu0 0
    %1561 = vmatprep.subr.bf16.mxu0 0
    %1562 = vmatpush1.bf16.msra.mxu0 0
    %1563 = vmatprep.subr.bf16.mxu0 0
    %1564 = vmatpush1.bf16.msra.mxu0 0
    %1565 = vmatprep.subr.bf16.mxu0 0
    %1566 = vmatpush1.bf16.msra.mxu0 0
    %1567 = vmatprep.subr.bf16.mxu0 0
    %1568 = vmatpush1.bf16.msra.mxu0 0
    %1569 = vmatprep.subr.bf16.mxu0 0
    %1570 = vmatpush1.bf16.msra.mxu0 0
    %1571 = vmatprep.subr.bf16.mxu0 0
    %1572 = vmatpush1.bf16.msra.mxu0 0
    %1573 = vmatprep.subr.bf16.mxu0 0
    %1574 = vmatpush1.bf16.msra.mxu0 0
    %1575 = vmatprep.subr.bf16.mxu0 0
    %1576 = vmatpush1.bf16.msra.mxu0 0
    %1577 = vmatprep.mubr.bf16.mxu0 0
    %1578 = vmatmul.mubr.bf16.gmra.mrb[0].mxu0 %v1256
    %v1579 = vpop.f32.mrb[0].mxu0
    %v1580 = vadd.f32 %v1539, %v1579
    %v1581 = vpop.f32.mrb[0].mxu0
    %v1582 = vadd.f32 %v1541, %v1581
    %v1583 = vpop.f32.mrb[0].mxu0
    %v1584 = vpop.f32.mrb[0].mxu0
    %1585 = vdwg.mxu0
    %v1586 = vmax.f32 %v1416, 0.0
    %v1587 = vmax.f32 %v1418, 0.0
    %v1588 = vmax.f32 %v1580, 0.0
    %v1589 = vmax.f32 %v1582, 0.0
    %v1590 = vpack.c.bf16 %v1586, %v1586
    %v1591 = vpack.c.bf16 %v1587, %v1587
    %v1592 = vpack.c.bf16 %v1588, %v1588
    %v1593 = vpack.c.bf16 %v1589, %v1589
    %v1594 = vld [vmem:[%s3] sm:$0xf]
    %v1595 = vld [vmem:[%s3 + $0x4] sm:$0xf]
    %v1596 = vld [vmem:[%s3 + $0x8] sm:$0xf]
    %v1597 = vld [vmem:[%s3 + $0xc] sm:$0xf]
    %v1598 = vld [vmem:[%s3 + $0x10] sm:$0xf]
    %v1599 = vld [vmem:[%s3 + $0x14] sm:$0xf]
    %v1600 = vld [vmem:[%s3 + $0x18] sm:$0xf]
    %v1601 = vld [vmem:[%s3 + $0x1c] sm:$0xf]
    %v1602 = vld [vmem:[%s3 + $0x20] sm:$0xf]
    %v1603 = vld [vmem:[%s3 + $0x24] sm:$0xf]
    %v1604 = vld [vmem:[%s3 + $0x28] sm:$0xf]
    %v1605 = vld [vmem:[%s3 + $0x2c] sm:$0xf]
    %v1606 = vld [vmem:[%s3 + $0x30] sm:$0xf]
    %v1607 = vld [vmem:[%s3 + $0x34] sm:$0xf]
    %v1608 = vld [vmem:[%s3 + $0x38] sm:$0xf]
    %v1609 = vld [vmem:[%s3 + $0x3c] sm:$0xf]
    %v1610 = vld [vmem:[%s3 + $0x40] sm:$0xf]
    %v1611 = vld [vmem:[%s3 + $0x44] sm:$0xf]
    %v1612 = vld [vmem:[%s3 + $0x48] sm:$0xf]
    %v1613 = vld [vmem:[%s3 + $0x4c] sm:$0xf]
    %v1614 = vld [vmem:[%s3 + $0x50] sm:$0xf]
    %v1615 = vld [vmem:[%s3 + $0x54] sm:$0xf]
    %v1616 = vld [vmem:[%s3 + $0x58] sm:$0xf]
    %v1617 = vld [vmem:[%s3 + $0x5c] sm:$0xf]
    %v1618 = vld [vmem:[%s3 + $0x60] sm:$0xf]
    %v1619 = vld [vmem:[%s3 + $0x64] sm:$0xf]
    %v1620 = vld [vmem:[%s3 + $0x68] sm:$0xf]
    %v1621 = vld [vmem:[%s3 + $0x6c] sm:$0xf]
    %v1622 = vld [vmem:[%s3 + $0x70] sm:$0xf]
    %v1623 = vld [vmem:[%s3 + $0x74] sm:$0xf]
    %v1624 = vld [vmem:[%s3 + $0x78] sm:$0xf]
    %v1625 = vld [vmem:[%s3 + $0x7c] sm:$0xf]
    %v1626 = vld [vmem:[%s3 + $0x80] sm:$0xf]
    %v1627 = vld [vmem:[%s3 + $0x84] sm:$0xf]
    %v1628 = vld [vmem:[%s3 + $0x88] sm:$0xf]
    %v1629 = vld [vmem:[%s3 + $0x8c] sm:$0xf]
    %v1630 = vld [vmem:[%s3 + $0x90] sm:$0xf]
    %v1631 = vld [vmem:[%s3 + $0x94] sm:$0xf]
    %v1632 = vld [vmem:[%s3 + $0x98] sm:$0xf]
    %v1633 = vld [vmem:[%s3 + $0x9c] sm:$0xf]
    %v1634 = vld [vmem:[%s3 + $0xa0] sm:$0xf]
    %v1635 = vld [vmem:[%s3 + $0xa4] sm:$0xf]
    %v1636 = vld [vmem:[%s3 + $0xa8] sm:$0xf]
    %v1637 = vld [vmem:[%s3 + $0xac] sm:$0xf]
    %v1638 = vld [vmem:[%s3 + $0xb0] sm:$0xf]
    %v1639 = vld [vmem:[%s3 + $0xb4] sm:$0xf]
    %v1640 = vld [vmem:[%s3 + $0xb8] sm:$0xf]
    %v1641 = vld [vmem:[%s3 + $0xbc] sm:$0xf]
    %v1642 = vld [vmem:[%s3 + $0xc0] sm:$0xf]
    %v1643 = vld [vmem:[%s3 + $0xc4] sm:$0xf]
    %v1644 = vld [vmem:[%s3 + $0xc8] sm:$0xf]
    %v1645 = vld [vmem:[%s3 + $0xcc] sm:$0xf]
    %v1646 = vld [vmem:[%s3 + $0xd0] sm:$0xf]
    %v1647 = vld [vmem:[%s3 + $0xd4] sm:$0xf]
    %v1648 = vld [vmem:[%s3 + $0xd8] sm:$0xf]
    %v1649 = vld [vmem:[%s3 + $0xdc] sm:$0xf]
    %v1650 = vld [vmem:[%s3 + $0xe0] sm:$0xf]
    %v1651 = vld [vmem:[%s3 + $0xe4] sm:$0xf]
    %v1652 = vld [vmem:[%s3 + $0xe8] sm:$0xf]
    %v1653 = vld [vmem:[%s3 + $0xec] sm:$0xf]
    %v1654 = vld [vmem:[%s3 + $0xf0] sm:$0xf]
    %v1655 = vld [vmem:[%s3 + $0xf4] sm:$0xf]
    %v1656 = vld [vmem:[%s3 + $0xf8] sm:$0xf]
    %v1657 = vld [vmem:[%s3 + $0xfc] sm:$0xf]
    %v1658 = vld [vmem:[%s4] sm:$0x1]
    %v1660 = vlaneseq
    %v1661 = vshrl.u32 %v1660, 7
    %v1662 = vsub.s32 0, %v1661
    %v1663 = vrot.slane %v1658, %v1662
    %v1729 = vunpack.c.l.b16 %v1594
    %v1730 = vunpack.c.l.b16 %v1595
    %v1731 = vunpack.c.l.b16 %v1596
    %v1732 = vunpack.c.l.b16 %v1597
    %v1733 = vunpack.c.l.b16 %v1598
    %v1734 = vunpack.c.l.b16 %v1599
    %v1735 = vunpack.c.l.b16 %v1600
    %v1736 = vunpack.c.l.b16 %v1601
    %v1737 = vunpack.c.l.b16 %v1602
    %v1738 = vunpack.c.l.b16 %v1603
    %v1739 = vunpack.c.l.b16 %v1604
    %v1740 = vunpack.c.l.b16 %v1605
    %v1741 = vunpack.c.l.b16 %v1606
    %v1742 = vunpack.c.l.b16 %v1607
    %v1743 = vunpack.c.l.b16 %v1608
    %v1744 = vunpack.c.l.b16 %v1609
    %v1745 = vunpack.c.l.b16 %v1610
    %v1746 = vunpack.c.l.b16 %v1611
    %v1747 = vunpack.c.l.b16 %v1612
    %v1748 = vunpack.c.l.b16 %v1613
    %v1749 = vunpack.c.l.b16 %v1614
    %v1750 = vunpack.c.l.b16 %v1615
    %v1751 = vunpack.c.l.b16 %v1616
    %v1752 = vunpack.c.l.b16 %v1617
    %v1753 = vunpack.c.l.b16 %v1618
    %v1754 = vunpack.c.l.b16 %v1619
    %v1755 = vunpack.c.l.b16 %v1620
    %v1756 = vunpack.c.l.b16 %v1621
    %v1757 = vunpack.c.l.b16 %v1622
    %v1758 = vunpack.c.l.b16 %v1623
    %v1759 = vunpack.c.l.b16 %v1624
    %v1760 = vunpack.c.l.b16 %v1625
    %v1761 = vunpack.c.l.b16 %v1626
    %v1762 = vunpack.c.l.b16 %v1627
    %v1763 = vunpack.c.l.b16 %v1628
    %v1764 = vunpack.c.l.b16 %v1629
    %v1765 = vunpack.c.l.b16 %v1630
    %v1766 = vunpack.c.l.b16 %v1631
    %v1767 = vunpack.c.l.b16 %v1632
    %v1768 = vunpack.c.l.b16 %v1633
    %v1769 = vunpack.c.l.b16 %v1634
    %v1770 = vunpack.c.l.b16 %v1635
    %v1771 = vunpack.c.l.b16 %v1636
    %v1772 = vunpack.c.l.b16 %v1637
    %v1773 = vunpack.c.l.b16 %v1638
    %v1774 = vunpack.c.l.b16 %v1639
    %v1775 = vunpack.c.l.b16 %v1640
    %v1776 = vunpack.c.l.b16 %v1641
    %v1777 = vunpack.c.l.b16 %v1642
    %v1778 = vunpack.c.l.b16 %v1643
    %v1779 = vunpack.c.l.b16 %v1644
    %v1780 = vunpack.c.l.b16 %v1645
    %v1781 = vunpack.c.l.b16 %v1646
    %v1782 = vunpack.c.l.b16 %v1647
    %v1783 = vunpack.c.l.b16 %v1648
    %v1784 = vunpack.c.l.b16 %v1649
    %v1785 = vunpack.c.l.b16 %v1650
    %v1786 = vunpack.c.l.b16 %v1651
    %v1787 = vunpack.c.l.b16 %v1652
    %v1788 = vunpack.c.l.b16 %v1653
    %v1789 = vunpack.c.l.b16 %v1654
    %v1790 = vunpack.c.l.b16 %v1655
    %v1791 = vunpack.c.l.b16 %v1656
    %v1792 = vunpack.c.l.b16 %v1657
    %v1793 = vpack.c.b16 %v1730, %v1729
    %v1794 = vpack.c.b16 %v1732, %v1731
    %v1795 = vpack.c.b16 %v1734, %v1733
    %v1796 = vpack.c.b16 %v1736, %v1735
    %v1797 = vpack.c.b16 %v1738, %v1737
    %v1798 = vpack.c.b16 %v1740, %v1739
    %v1799 = vpack.c.b16 %v1742, %v1741
    %v1800 = vpack.c.b16 %v1744, %v1743
    %v1801 = vpack.c.b16 %v1746, %v1745
    %v1802 = vpack.c.b16 %v1748, %v1747
    %v1803 = vpack.c.b16 %v1750, %v1749
    %v1804 = vpack.c.b16 %v1752, %v1751
    %v1805 = vpack.c.b16 %v1754, %v1753
    %v1806 = vpack.c.b16 %v1756, %v1755
    %v1807 = vpack.c.b16 %v1758, %v1757
    %v1808 = vpack.c.b16 %v1760, %v1759
    %v1809 = vpack.c.b16 %v1762, %v1761
    %v1810 = vpack.c.b16 %v1764, %v1763
    %v1811 = vpack.c.b16 %v1766, %v1765
    %v1812 = vpack.c.b16 %v1768, %v1767
    %v1813 = vpack.c.b16 %v1770, %v1769
    %v1814 = vpack.c.b16 %v1772, %v1771
    %v1815 = vpack.c.b16 %v1774, %v1773
    %v1816 = vpack.c.b16 %v1776, %v1775
    %v1817 = vpack.c.b16 %v1778, %v1777
    %v1818 = vpack.c.b16 %v1780, %v1779
    %v1819 = vpack.c.b16 %v1782, %v1781
    %v1820 = vpack.c.b16 %v1784, %v1783
    %v1821 = vpack.c.b16 %v1786, %v1785
    %v1822 = vpack.c.b16 %v1788, %v1787
    %v1823 = vpack.c.b16 %v1790, %v1789
    %v1824 = vpack.c.b16 %v1792, %v1791
    %1857 = vmatprep.subr.bf16.mxu0 0
    %1858 = vmatpush1.bf16.msra.mxu0 %v1793
    %1859 = vmatprep.subr.bf16.mxu0 0
    %1860 = vmatpush1.bf16.msra.mxu0 %v1794
    %1861 = vmatprep.subr.bf16.mxu0 0
    %1862 = vmatpush1.bf16.msra.mxu0 %v1795
    %1863 = vmatprep.subr.bf16.mxu0 0
    %1864 = vmatpush1.bf16.msra.mxu0 %v1796
    %1865 = vmatprep.subr.bf16.mxu0 0
    %1866 = vmatpush1.bf16.msra.mxu0 %v1797
    %1867 = vmatprep.subr.bf16.mxu0 0
    %1868 = vmatpush1.bf16.msra.mxu0 %v1798
    %1869 = vmatprep.subr.bf16.mxu0 0
    %1870 = vmatpush1.bf16.msra.mxu0 %v1799
    %1871 = vmatprep.subr.bf16.mxu0 0
    %1872 = vmatpush1.bf16.msra.mxu0 %v1800
    %1873 = vmatprep.subr.bf16.mxu0 0
    %1874 = vmatpush1.bf16.msra.mxu0 %v1801
    %1875 = vmatprep.subr.bf16.mxu0 0
    %1876 = vmatpush1.bf16.msra.mxu0 %v1802
    %1877 = vmatprep.subr.bf16.mxu0 0
    %1878 = vmatpush1.bf16.msra.mxu0 %v1803
    %1879 = vmatprep.subr.bf16.mxu0 0
    %1880 = vmatpush1.bf16.msra.mxu0 %v1804
    %1881 = vmatprep.subr.bf16.mxu0 0
    %1882 = vmatpush1.bf16.msra.mxu0 %v1805
    %1883 = vmatprep.subr.bf16.mxu0 0
    %1884 = vmatpush1.bf16.msra.mxu0 %v1806
    %1885 = vmatprep.subr.bf16.mxu0 0
    %1886 = vmatpush1.bf16.msra.mxu0 %v1807
    %1887 = vmatprep.subr.bf16.mxu0 0
    %1888 = vmatpush1.bf16.msra.mxu0 %v1808
    %1889 = vmatprep.mubr.bf16.mxu0 %v1591
    %1890 = vmatmul.mubr.bf16.gmra.mrb[0].mxu0 %v1590
    %v1891 = vpop.f32.mrb[0].mxu0
    %v1892 = vadd.f32 %v1663, %v1891
    %v1893 = vpop.f32.mrb[0].mxu0
    %v1894 = vpop.f32.mrb[0].mxu0
    %v1895 = vpop.f32.mrb[0].mxu0
    %1896 = vdwg.mxu0
    %1897 = vmatprep.subr.bf16.mxu0 0
    %1898 = vmatpush1.bf16.msra.mxu0 %v1809
    %1899 = vmatprep.subr.bf16.mxu0 0
    %1900 = vmatpush1.bf16.msra.mxu0 %v1810
    %1901 = vmatprep.subr.bf16.mxu0 0
    %1902 = vmatpush1.bf16.msra.mxu0 %v1811
    %1903 = vmatprep.subr.bf16.mxu0 0
    %1904 = vmatpush1.bf16.msra.mxu0 %v1812
    %1905 = vmatprep.subr.bf16.mxu0 0
    %1906 = vmatpush1.bf16.msra.mxu0 %v1813
    %1907 = vmatprep.subr.bf16.mxu0 0
    %1908 = vmatpush1.bf16.msra.mxu0 %v1814
    %1909 = vmatprep.subr.bf16.mxu0 0
    %1910 = vmatpush1.bf16.msra.mxu0 %v1815
    %1911 = vmatprep.subr.bf16.mxu0 0
    %1912 = vmatpush1.bf16.msra.mxu0 %v1816
    %1913 = vmatprep.subr.bf16.mxu0 0
    %1914 = vmatpush1.bf16.msra.mxu0 %v1817
    %1915 = vmatprep.subr.bf16.mxu0 0
    %1916 = vmatpush1.bf16.msra.mxu0 %v1818
    %1917 = vmatprep.subr.bf16.mxu0 0
    %1918 = vmatpush1.bf16.msra.mxu0 %v1819
    %1919 = vmatprep.subr.bf16.mxu0 0
    %1920 = vmatpush1.bf16.msra.mxu0 %v1820
    %1921 = vmatprep.subr.bf16.mxu0 0
    %1922 = vmatpush1.bf16.msra.mxu0 %v1821
    %1923 = vmatprep.subr.bf16.mxu0 0
    %1924 = vmatpush1.bf16.msra.mxu0 %v1822
    %1925 = vmatprep.subr.bf16.mxu0 0
    %1926 = vmatpush1.bf16.msra.mxu0 %v1823
    %1927 = vmatprep.subr.bf16.mxu0 0
    %1928 = vmatpush1.bf16.msra.mxu0 %v1824
    %1929 = vmatprep.mubr.bf16.mxu0 %v1593
    %1930 = vmatmul.mubr.bf16.gmra.mrb[0].mxu0 %v1592
    %v1931 = vpop.f32.mrb[0].mxu0
    %v1932 = vadd.f32 %v1892, %v1931
    %v1933 = vpop.f32.mrb[0].mxu0
    %v1934 = vpop.f32.mrb[0].mxu0
    %v1935 = vpop.f32.mrb[0].mxu0
    %1936 = vdwg.mxu0
    %v1937 = vmax.f32 %v1932, 0.0
    %v1938 = vpack.c.bf16 %v1937, %v1937
    %v1939 = vld [vmem:[%s5] sm:$0xf]
    %v1940 = vld [vmem:[%s5 + $0x4] sm:$0xf]
    %v1941 = vld [vmem:[%s5 + $0x8] sm:$0xf]
    %v1942 = vld [vmem:[%s5 + $0xc] sm:$0xf]
    %v1943 = vld [vmem:[%s5 + $0x10] sm:$0xf]
    %v1944 = vld [vmem:[%s5 + $0x14] sm:$0xf]
    %v1945 = vld [vmem:[%s5 + $0x18] sm:$0xf]
    %v1946 = vld [vmem:[%s5 + $0x1c] sm:$0xf]
    %v1947 = vld [vmem:[%s5 + $0x20] sm:$0xf]
    %v1948 = vld [vmem:[%s5 + $0x24] sm:$0xf]
    %v1949 = vld [vmem:[%s5 + $0x28] sm:$0xf]
    %v1950 = vld [vmem:[%s5 + $0x2c] sm:$0xf]
    %v1951 = vld [vmem:[%s5 + $0x30] sm:$0xf]
    %v1952 = vld [vmem:[%s5 + $0x34] sm:$0xf]
    %v1953 = vld [vmem:[%s5 + $0x38] sm:$0xf]
    %v1954 = vld [vmem:[%s5 + $0x3c] sm:$0xf]
    %v1955 = vld [vmem:[%s6] sm:$0x1]
    %v1957 = vlaneseq
    %v1958 = vshrl.u32 %v1957, 7
    %v1959 = vsub.s32 0, %v1958
    %v1960 = vrot.slane %v1955, %v1959
    %v1978 = vunpack.c.l.b16 %v1939
    %v1979 = vunpack.c.l.b16 %v1940
    %v1980 = vunpack.c.l.b16 %v1941
    %v1981 = vunpack.c.l.b16 %v1942
    %v1982 = vunpack.c.l.b16 %v1943
    %v1983 = vunpack.c.l.b16 %v1944
    %v1984 = vunpack.c.l.b16 %v1945
    %v1985 = vunpack.c.l.b16 %v1946
    %v1986 = vunpack.c.l.b16 %v1947
    %v1987 = vunpack.c.l.b16 %v1948
    %v1988 = vunpack.c.l.b16 %v1949
    %v1989 = vunpack.c.l.b16 %v1950
    %v1990 = vunpack.c.l.b16 %v1951
    %v1991 = vunpack.c.l.b16 %v1952
    %v1992 = vunpack.c.l.b16 %v1953
    %v1993 = vunpack.c.l.b16 %v1954
    %v1994 = vpack.c.b16 %v1979, %v1978
    %v1995 = vpack.c.b16 %v1981, %v1980
    %v1996 = vpack.c.b16 %v1983, %v1982
    %v1997 = vpack.c.b16 %v1985, %v1984
    %v1998 = vpack.c.b16 %v1987, %v1986
    %v1999 = vpack.c.b16 %v1989, %v1988
    %v2000 = vpack.c.b16 %v1991, %v1990
    %v2001 = vpack.c.b16 %v1993, %v1992
    %2010 = vmatprep.subr.bf16.mxu0 0
    %2011 = vmatpush1.bf16.msra.mxu0 %v1994
    %2012 = vmatprep.subr.bf16.mxu0 0
    %2013 = vmatpush1.bf16.msra.mxu0 %v1995
    %2014 = vmatprep.subr.bf16.mxu0 0
    %2015 = vmatpush1.bf16.msra.mxu0 %v1996
    %2016 = vmatprep.subr.bf16.mxu0 0
    %2017 = vmatpush1.bf16.msra.mxu0 %v1997
    %2018 = vmatprep.subr.bf16.mxu0 0
    %2019 = vmatpush1.bf16.msra.mxu0 %v1998
    %2020 = vmatprep.subr.bf16.mxu0 0
    %2021 = vmatpush1.bf16.msra.mxu0 %v1999
    %2022 = vmatprep.subr.bf16.mxu0 0
    %2023 = vmatpush1.bf16.msra.mxu0 %v2000
    %2024 = vmatprep.subr.bf16.mxu0 0
    %2025 = vmatpush1.bf16.msra.mxu0 %v2001
    %2026 = vmatprep.subr.bf16.mxu0 0
    %2027 = vmatpush1.bf16.msra.mxu0 0
    %2028 = vmatprep.subr.bf16.mxu0 0
    %2029 = vmatpush1.bf16.msra.mxu0 0
    %2030 = vmatprep.subr.bf16.mxu0 0
    %2031 = vmatpush1.bf16.msra.mxu0 0
    %2032 = vmatprep.subr.bf16.mxu0 0
    %2033 = vmatpush1.bf16.msra.mxu0 0
    %2034 = vmatprep.subr.bf16.mxu0 0
    %2035 = vmatpush1.bf16.msra.mxu0 0
    %2036 = vmatprep.subr.bf16.mxu0 0
    %2037 = vmatpush1.bf16.msra.mxu0 0
    %2038 = vmatprep.subr.bf16.mxu0 0
    %2039 = vmatpush1.bf16.msra.mxu0 0
    %2040 = vmatprep.subr.bf16.mxu0 0
    %2041 = vmatpush1.bf16.msra.mxu0 0
    %2042 = vmatprep.mubr.bf16.mxu0 0
    %2043 = vmatmul.mubr.bf16.gmra.mrb[0].mxu0 %v1938
    %v2044 = vpop.f32.mrb[0].mxu0
    %v2045 = vadd.f32 %v1960, %v2044
    %v2046 = vpop.f32.mrb[0].mxu0
    %v2047 = vpop.f32.mrb[0].mxu0
    %v2048 = vpop.f32.mrb[0].mxu0
    %2049 = vdwg.mxu0
    %v2050 = vxor.u32 %v2045, 2147483648
    %v2051 = vmul.f32 %v2050, 1.442695
    %v2052 = vpow.pop %v2051
    %v2053 = vadd.f32 %v2052, 1.0
    %v2054 = vrcp.pop %v2053
    %v2055 = vmul.f32 1.0, %v2054
    %2056 = vst.msk [vmem:[#allocation5] sm:$0xff] %vm1254, %v2055
    // Predicated region
    $region34: #{encoder_forward.1} parent=1 // pred_check
      _
    $region35: #{encoder_forward.1} parent=1 // pred_check_branch
      %2058 = sbr.rel (0) target = $region37
    $region36: #{encoder_forward.1} parent=1 // pred_region
      %s2060 = ssub.s32 128, 128
      %2061 = vsyncadd [#allocation4], %s2060
      %s2063 = sshll.u32 [#allocation5], 4
      %s2064 = int_to_ptr.vmem [resolvable:$true] %s2063
      %2066 = dma.vmem_to_hbm [thread:$0]  %s2064, 128, %s7, [#allocation4]
    $region37: #{encoder_forward.1} parent=1 // pred_fallthru
      _
    // Predicated region
    $region38: #{encoder_forward.1} parent=1 // pred_check
      _
    $region39: #{encoder_forward.1} parent=1 // pred_check_branch
      %2068 = sbr.rel (0) target = $region41
    $region40: #{encoder_forward.1} parent=1 // pred_region
      %2069 = dma.done [#allocation4], 128
    $region41: #{encoder_forward.1} parent=1 // pred_fallthru
      _
    %2070 = vsyncpa [#allocation3], 1
    %2071 = vsyncpa [#allocation4], 1

</llo_original>
